<compile_context>
chip_gen: v6e
topology: v6e:2x2x1
jax: 0.10.0
libtpu: 0.0.40
codegen_flags: <defaults>
</compile_context>

<pallas_src>
import math
import jax
import jax.numpy as jnp
from jax.experimental import pallas as pl
from jax.experimental.pallas import tpu as pltpu


# ----------------------------------------------------------------------------
# In-kernel math helpers.
# ----------------------------------------------------------------------------
def _gelu_tanh(x):
    # tanh-approx GELU (matches jax.nn.gelu(approximate=True)); the tanh goes
    # to the EUP which has its own bundle slot.
    c = math.sqrt(2.0 / math.pi)
    return 0.5 * x * (1.0 + jnp.tanh(c * (x + 0.044715 * (x * x * x))))


# ----------------------------------------------------------------------------
# Fused kernel: interest extraction over the job history + 4-layer MLP.
#   scores[b,s]  = <history[b,s,:], target_job[b,:]>           (MXU)
#   w            = softmax_s(scores)
#   att_pool     = sum_s w[b,s]   * history[b,s,:]             (MXU)
#   mean_pool    = sum_s (1/S)    * history[b,s,:]             (same MXU matmul)
#   h1           = tu@W1[:D] + att@W1[D:2D] + mean@W1[2D:] + b1   (no concat)
#   logits       = MLP tail (GELU/Linear x3)
# ----------------------------------------------------------------------------
def dien_fused_kernel(tgt_user_ref, tgt_job_ref, hist_ref,
                      w1u_ref, w1a_ref, w1m_ref, b1_ref,
                      w2_ref, b2_ref, w3_ref, b3_ref, w4_ref, b4_ref,
                      out_ref):
    tgt_user = tgt_user_ref[...]            # [B, D]
    tgt_job = tgt_job_ref[...]              # [B, D]
    hist = hist_ref[...]                    # [B, S, D]
    B, S, D = hist.shape

    # ---- interest extraction ------------------------------------------------
    # scores: [B, 1, S] via batched matmul (q-tile = 1, k-tile = S)
    scores = jnp.einsum('bqd,bkd->bqk', tgt_job[:, None, :], hist,
                        preferred_element_type=jnp.float32)
    m = jnp.max(scores, axis=-1, keepdims=True)
    e = jnp.exp(scores - m)
    denom = jnp.sum(e, axis=-1, keepdims=True)
    attn_w = e * pl.reciprocal(denom, approx=True)               # [B, 1, S]

    # Fold mean pooling into the same batched matmul: rows = [softmax_w; 1/S].
    mean_w = jnp.full_like(attn_w, 1.0 / S)                      # [B, 1, S]
    pool_w = jnp.concatenate([attn_w, mean_w], axis=1)           # [B, 2, S]
    pooled = jnp.einsum('bqk,bkd->bqd', pool_w, hist,
                        preferred_element_type=jnp.float32)      # [B, 2, D]
    att_pool = pooled[:, 0, :]                                   # [B, D]
    mean_pool = pooled[:, 1, :]                                  # [B, D]

    # ---- MLP (first-layer concat replaced by row-split W1) ------------------
    h = (jnp.dot(tgt_user, w1u_ref[...], preferred_element_type=jnp.float32)
         + jnp.dot(att_pool, w1a_ref[...], preferred_element_type=jnp.float32)
         + jnp.dot(mean_pool, w1m_ref[...], preferred_element_type=jnp.float32)
         + b1_ref[...])
    h = _gelu_tanh(h)
    h = jnp.dot(h, w2_ref[...], preferred_element_type=jnp.float32) + b2_ref[...]
    h = _gelu_tanh(h)
    h = jnp.dot(h, w3_ref[...], preferred_element_type=jnp.float32) + b3_ref[...]
    h = _gelu_tanh(h)
    h = jnp.dot(h, w4_ref[...], preferred_element_type=jnp.float32) + b4_ref[0, 0]
    out_ref[...] = h                         # [B, 1] (sub-128 store is fine at B=8)


# ----------------------------------------------------------------------------
# Wrapper.
# ----------------------------------------------------------------------------
def dien_forward(params, target_user, history_users, sequence_mask_users,
                 target_job, history_jobs, sequence_mask_jobs, labels=None):
    # TODO(synk): sequence masks / labels / user-history branch are unused by
    # the visible reference forward; confirmed-ignored here.
    del history_users, sequence_mask_users, sequence_mask_jobs, labels

    B, S, D = history_jobs.shape
    (w1, b1), (w2, b2), (w3, b3), (w4, b4) = params
    # Split W1 rows so the [target_user | att_pool | mean_pool] concat is
    # never materialized anywhere (XLA or VMEM).
    w1u, w1a, w1m = w1[:D], w1[D:2 * D], w1[2 * D:]

    def vmem_spec(shape):
        return pl.BlockSpec(shape, lambda i, _n=len(shape): (0,) * _n)

    in_specs = [
        vmem_spec(target_user.shape),
        vmem_spec(target_job.shape),
        vmem_spec(history_jobs.shape),
        vmem_spec(w1u.shape), vmem_spec(w1a.shape), vmem_spec(w1m.shape),
        vmem_spec(b1.shape),
        vmem_spec(w2.shape), vmem_spec(b2.shape),
        vmem_spec(w3.shape), vmem_spec(b3.shape),
        vmem_spec(w4.shape),
        pl.BlockSpec(memory_space=pltpu.MemorySpace.SMEM),   # b4 is a (1,1) scalar
    ]

    logits = pl.pallas_call(
        dien_fused_kernel,
        out_shape=jax.ShapeDtypeStruct((B, 1), jnp.float32),
        grid=(1,),
        in_specs=in_specs,
        out_specs=pl.BlockSpec((B, 1), lambda i: (0, 0)),
        compiler_params=pltpu.CompilerParams(
            dimension_semantics=("parallel",)),
    )(target_user, target_job, history_jobs,
      w1u, w1a, w1m, b1, w2, b2, w3, b3, w4, b4)

    return jnp.squeeze(logits, axis=-1)                      # [B]


def init_params(key, d_model):
    d_in = 3 * d_model
    h1, h2, h3 = 4 * d_model, 2 * d_model, d_model   # mirrors 4096/1024/256 structure
    dims = [(d_in, h1), (h1, h2), (h2, h3), (h3, 1)]
    params = []
    for din, dout in dims:
        key, sub = jax.random.split(key)
        w = jax.random.normal(sub, (din, dout), jnp.float32) * 0.02
        b = jnp.zeros((1, dout), jnp.float32)
        params.append((w, b))
    return params


# Pure-JAX reference (same math, tanh GELU) for a correctness spot-check.
def dien_reference(params, target_user, target_job, history_jobs):
    (w1, b1), (w2, b2), (w3, b3), (w4, b4) = params
    scores = jnp.einsum('bsd,bd->bs', history_jobs, target_job)
    w = jax.nn.softmax(scores, axis=-1)
    att = jnp.einsum('bs,bsd->bd', w, history_jobs)
    mean = jnp.mean(history_jobs, axis=1)
    x = jnp.concatenate([target_user, att, mean], axis=-1)
    h = jax.nn.gelu(x @ w1 + b1, approximate=True)
    h = jax.nn.gelu(h @ w2 + b2, approximate=True)
    h = jax.nn.gelu(h @ w3 + b3, approximate=True)
    return jnp.squeeze(h @ w4 + b4, axis=-1)


if __name__ == "__main__":
    B, S, D = 8, 8, 64          # small shapes: batch=8, seq=8, d_model=64
    key = jax.random.PRNGKey(0)
    k1, k2, k3, k4, kp = jax.random.split(key, 5)

    target_user = jax.random.normal(k1, (B, D), jnp.float32)
    history_users = jax.random.normal(k2, (B, S, D), jnp.float32)
    sequence_mask_users = jnp.ones((B, S), jnp.float32)
    target_job = jax.random.normal(k3, (B, D), jnp.float32)
    history_jobs = jax.random.normal(k4, (B, S, D), jnp.float32)
    sequence_mask_jobs = jnp.ones((B, S), jnp.float32)

    params = init_params(kp, D)

    logits = dien_forward(params, target_user, history_users, sequence_mask_users,
                          target_job, history_jobs, sequence_mask_jobs)
    logits = jax.block_until_ready(logits)

    assert logits.shape == (B,)
    assert bool(jnp.all(jnp.isfinite(logits)))

    ref = dien_reference(params, target_user, target_job, history_jobs)
    assert jnp.allclose(logits, ref, rtol=1e-2, atol=1e-3), (logits, ref)

    print("KERNEL_OK")
</pallas_src>

<mosaic_0001>
module attributes {stable_mosaic.version = 11 : i64} {
  func.func @dien_fused_kernel(%arg0: i32, %arg1: memref<8x64xf32, #tpu.memory_space<vmem>>, %arg2: memref<8x64xf32, #tpu.memory_space<vmem>>, %arg3: memref<8x8x64xf32, #tpu.memory_space<vmem>>, %arg4: memref<64x256xf32, #tpu.memory_space<vmem>>, %arg5: memref<64x256xf32, #tpu.memory_space<vmem>>, %arg6: memref<64x256xf32, #tpu.memory_space<vmem>>, %arg7: memref<1x256xf32, #tpu.memory_space<vmem>>, %arg8: memref<256x128xf32, #tpu.memory_space<vmem>>, %arg9: memref<1x128xf32, #tpu.memory_space<vmem>>, %arg10: memref<128x64xf32, #tpu.memory_space<vmem>>, %arg11: memref<1x64xf32, #tpu.memory_space<vmem>>, %arg12: memref<64x1xf32, #tpu.memory_space<vmem>>, %arg13: memref<1x1xf32, #tpu.memory_space<smem>>, %arg14: memref<8x1xf32, #tpu.memory_space<vmem>>) attributes {dimension_semantics = [#tpu.dimension_semantics<parallel>], iteration_bounds = array<i64: 1>, scalar_prefetch = 0 : i64, scratch_operands = 0 : i64, tpu.core_type = #tpu.core_type<tc>, window_params = [{pipeline_mode = #tpu.pipeline_mode<synchronous>, transform_indices = @transform_0, window_bounds = array<i64: 8, 64>}, {pipeline_mode = #tpu.pipeline_mode<synchronous>, transform_indices = @transform_1, window_bounds = array<i64: 8, 64>}, {pipeline_mode = #tpu.pipeline_mode<synchronous>, transform_indices = @transform_2, window_bounds = array<i64: 8, 8, 64>}, {pipeline_mode = #tpu.pipeline_mode<synchronous>, transform_indices = @transform_3, window_bounds = array<i64: 64, 256>}, {pipeline_mode = #tpu.pipeline_mode<synchronous>, transform_indices = @transform_4, window_bounds = array<i64: 64, 256>}, {pipeline_mode = #tpu.pipeline_mode<synchronous>, transform_indices = @transform_5, window_bounds = array<i64: 64, 256>}, {pipeline_mode = #tpu.pipeline_mode<synchronous>, transform_indices = @transform_6, window_bounds = array<i64: 1, 256>}, {pipeline_mode = #tpu.pipeline_mode<synchronous>, transform_indices = @transform_7, window_bounds = array<i64: 256, 128>}, {pipeline_mode = #tpu.pipeline_mode<synchronous>, transform_indices = @transform_8, window_bounds = array<i64: 1, 128>}, {pipeline_mode = #tpu.pipeline_mode<synchronous>, transform_indices = @transform_9, window_bounds = array<i64: 128, 64>}, {pipeline_mode = #tpu.pipeline_mode<synchronous>, transform_indices = @transform_10, window_bounds = array<i64: 1, 64>}, {pipeline_mode = #tpu.pipeline_mode<synchronous>, transform_indices = @transform_11, window_bounds = array<i64: 64, 1>}, {transform_indices = @transform_12, window_bounds = array<i64: 1, 1>}, {pipeline_mode = #tpu.pipeline_mode<synchronous>, transform_indices = @transform_13, window_bounds = array<i64: 8, 1>}]} {
    %c0 = arith.constant 0 : index
    %c0_0 = arith.constant 0 : index
    %0 = vector.load %arg1[%c0, %c0_0] : memref<8x64xf32, #tpu.memory_space<vmem>>, vector<8x64xf32>
    %c0_1 = arith.constant 0 : index
    %c0_2 = arith.constant 0 : index
    %1 = vector.load %arg2[%c0_1, %c0_2] : memref<8x64xf32, #tpu.memory_space<vmem>>, vector<8x64xf32>
    %c0_3 = arith.constant 0 : index
    %c0_4 = arith.constant 0 : index
    %c0_5 = arith.constant 0 : index
    %2 = vector.load %arg3[%c0_3, %c0_4, %c0_5] : memref<8x8x64xf32, #tpu.memory_space<vmem>>, vector<8x8x64xf32>
    %3 = vector.shape_cast %1 : vector<8x64xf32> to vector<8x1x64xf32>
    "tpu.trace_start"() <{level = 10 : i32, message = "bqd,bkd->bqk"}> : () -> ()
    %cst = arith.constant dense<0.000000e+00> : vector<8x1x8xf32>
    %4 = tpu.matmul %3, %2, %cst {dimension_numbers = #tpu.dot_dimension_numbers<[2], [2], [1], [1], [0, 0, 0, 1, 1, 1], [0], [0]>} : vector<8x1x64xf32>, vector<8x8x64xf32>, vector<8x1x8xf32> -> vector<8x1x8xf32>
    "tpu.trace_stop"() : () -> ()
    %cst_6 = arith.constant dense<0xFF800000> : vector<8x1xf32>
    %5 = vector.multi_reduction <maximumf>, %4, %cst_6 [2] : vector<8x1x8xf32> to vector<8x1xf32>
    %6 = vector.shape_cast %5 : vector<8x1xf32> to vector<8x1x1xf32>
    %7 = vector.broadcast %6 : vector<8x1x1xf32> to vector<8x1x8xf32>
    %8 = arith.subf %4, %7 : vector<8x1x8xf32>
    %9 = math.exp %8 : vector<8x1x8xf32>
    %cst_7 = arith.constant dense<0.000000e+00> : vector<8x1xf32>
    %10 = vector.multi_reduction <add>, %9, %cst_7 [2] : vector<8x1x8xf32> to vector<8x1xf32>
    %11 = vector.shape_cast %10 : vector<8x1xf32> to vector<8x1x1xf32>
    %12 = tpu.reciprocal %11 {approx = true} : vector<8x1x1xf32> -> vector<8x1x1xf32>
    %13 = vector.broadcast %12 : vector<8x1x1xf32> to vector<8x1x8xf32>
    %14 = arith.mulf %9, %13 : vector<8x1x8xf32>
    %cst_8 = arith.constant 1.250000e-01 : f32
    %15 = vector.broadcast %cst_8 : f32 to vector<8x1x8xf32>
    %16 = tpu.concatenate %14, %15 in 1 : vector<8x1x8xf32>, vector<8x1x8xf32> -> vector<8x2x8xf32>
    "tpu.trace_start"() <{level = 10 : i32, message = "bqk,bkd->bqd"}> : () -> ()
    %cst_9 = arith.constant dense<0.000000e+00> : vector<8x2x64xf32>
    %17 = tpu.matmul %16, %2, %cst_9 {dimension_numbers = #tpu.dot_dimension_numbers<[2], [1], [1], [2], [0, 0, 0, 1, 1, 2], [0], [0]>} : vector<8x2x8xf32>, vector<8x8x64xf32>, vector<8x2x64xf32> -> vector<8x2x64xf32>
    "tpu.trace_stop"() : () -> ()
    %18 = vector.extract_strided_slice %17 {offsets = [0, 0, 0], sizes = [8, 1, 64], strides = [1, 1, 1]} : vector<8x2x64xf32> to vector<8x1x64xf32>
    %19 = vector.shape_cast %18 : vector<8x1x64xf32> to vector<8x64xf32>
    %20 = vector.extract_strided_slice %17 {offsets = [0, 1, 0], sizes = [8, 1, 64], strides = [1, 1, 1]} : vector<8x2x64xf32> to vector<8x1x64xf32>
    %21 = vector.shape_cast %20 : vector<8x1x64xf32> to vector<8x64xf32>
    %c0_10 = arith.constant 0 : index
    %c0_11 = arith.constant 0 : index
    %22 = vector.load %arg4[%c0_10, %c0_11] : memref<64x256xf32, #tpu.memory_space<vmem>>, vector<64x256xf32>
    %cst_12 = arith.constant dense<0.000000e+00> : vector<8x256xf32>
    %23 = tpu.matmul %0, %22, %cst_12 {dimension_numbers = #tpu.dot_dimension_numbers<[1], [0], [0], [1], [0, 0, 1, 1], [], []>} : vector<8x64xf32>, vector<64x256xf32>, vector<8x256xf32> -> vector<8x256xf32>
    %c0_13 = arith.constant 0 : index
    %c0_14 = arith.constant 0 : index
    %24 = vector.load %arg5[%c0_13, %c0_14] : memref<64x256xf32, #tpu.memory_space<vmem>>, vector<64x256xf32>
    %cst_15 = arith.constant dense<0.000000e+00> : vector<8x256xf32>
    %25 = tpu.matmul %19, %24, %cst_15 {dimension_numbers = #tpu.dot_dimension_numbers<[1], [0], [0], [1], [0, 0, 1, 1], [], []>} : vector<8x64xf32>, vector<64x256xf32>, vector<8x256xf32> -> vector<8x256xf32>
    %26 = arith.addf %23, %25 : vector<8x256xf32>
    %c0_16 = arith.constant 0 : index
    %c0_17 = arith.constant 0 : index
    %27 = vector.load %arg6[%c0_16, %c0_17] : memref<64x256xf32, #tpu.memory_space<vmem>>, vector<64x256xf32>
    %cst_18 = arith.constant dense<0.000000e+00> : vector<8x256xf32>
    %28 = tpu.matmul %21, %27, %cst_18 {dimension_numbers = #tpu.dot_dimension_numbers<[1], [0], [0], [1], [0, 0, 1, 1], [], []>} : vector<8x64xf32>, vector<64x256xf32>, vector<8x256xf32> -> vector<8x256xf32>
    %29 = arith.addf %26, %28 : vector<8x256xf32>
    %c0_19 = arith.constant 0 : index
    %c0_20 = arith.constant 0 : index
    %30 = vector.load %arg7[%c0_19, %c0_20] : memref<1x256xf32, #tpu.memory_space<vmem>>, vector<1x256xf32>
    %31 = vector.broadcast %30 : vector<1x256xf32> to vector<8x256xf32>
    %32 = arith.addf %29, %31 : vector<8x256xf32>
    %cst_21 = arith.constant 5.000000e-01 : f32
    %33 = vector.broadcast %cst_21 : f32 to vector<8x256xf32>
    %34 = arith.mulf %33, %32 : vector<8x256xf32>
    %35 = arith.mulf %32, %32 : vector<8x256xf32>
    %36 = arith.mulf %35, %32 : vector<8x256xf32>
    %cst_22 = arith.constant 4.471500e-02 : f32
    %37 = vector.broadcast %cst_22 : f32 to vector<8x256xf32>
    %38 = arith.mulf %37, %36 : vector<8x256xf32>
    %39 = arith.addf %32, %38 : vector<8x256xf32>
    %cst_23 = arith.constant 0.797884583 : f32
    %40 = vector.broadcast %cst_23 : f32 to vector<8x256xf32>
    %41 = arith.mulf %40, %39 : vector<8x256xf32>
    %42 = math.tanh %41 : vector<8x256xf32>
    %cst_24 = arith.constant 1.000000e+00 : f32
    %43 = vector.broadcast %cst_24 : f32 to vector<8x256xf32>
    %44 = arith.addf %43, %42 : vector<8x256xf32>
    %45 = arith.mulf %34, %44 : vector<8x256xf32>
    %c0_25 = arith.constant 0 : index
    %c0_26 = arith.constant 0 : index
    %46 = vector.load %arg8[%c0_25, %c0_26] : memref<256x128xf32, #tpu.memory_space<vmem>>, vector<256x128xf32>
    %cst_27 = arith.constant dense<0.000000e+00> : vector<8x128xf32>
    %47 = tpu.matmul %45, %46, %cst_27 {dimension_numbers = #tpu.dot_dimension_numbers<[1], [0], [0], [1], [0, 0, 1, 1], [], []>} : vector<8x256xf32>, vector<256x128xf32>, vector<8x128xf32> -> vector<8x128xf32>
    %c0_28 = arith.constant 0 : index
    %c0_29 = arith.constant 0 : index
    %48 = vector.load %arg9[%c0_28, %c0_29] : memref<1x128xf32, #tpu.memory_space<vmem>>, vector<1x128xf32>
    %49 = vector.broadcast %48 : vector<1x128xf32> to vector<8x128xf32>
    %50 = arith.addf %47, %49 : vector<8x128xf32>
    %cst_30 = arith.constant 5.000000e-01 : f32
    %51 = vector.broadcast %cst_30 : f32 to vector<8x128xf32>
    %52 = arith.mulf %51, %50 : vector<8x128xf32>
    %53 = arith.mulf %50, %50 : vector<8x128xf32>
    %54 = arith.mulf %53, %50 : vector<8x128xf32>
    %cst_31 = arith.constant 4.471500e-02 : f32
    %55 = vector.broadcast %cst_31 : f32 to vector<8x128xf32>
    %56 = arith.mulf %55, %54 : vector<8x128xf32>
    %57 = arith.addf %50, %56 : vector<8x128xf32>
    %cst_32 = arith.constant 0.797884583 : f32
    %58 = vector.broadcast %cst_32 : f32 to vector<8x128xf32>
    %59 = arith.mulf %58, %57 : vector<8x128xf32>
    %60 = math.tanh %59 : vector<8x128xf32>
    %cst_33 = arith.constant 1.000000e+00 : f32
    %61 = vector.broadcast %cst_33 : f32 to vector<8x128xf32>
    %62 = arith.addf %61, %60 : vector<8x128xf32>
    %63 = arith.mulf %52, %62 : vector<8x128xf32>
    %c0_34 = arith.constant 0 : index
    %c0_35 = arith.constant 0 : index
    %64 = vector.load %arg10[%c0_34, %c0_35] : memref<128x64xf32, #tpu.memory_space<vmem>>, vector<128x64xf32>
    %cst_36 = arith.constant dense<0.000000e+00> : vector<8x64xf32>
    %65 = tpu.matmul %63, %64, %cst_36 {dimension_numbers = #tpu.dot_dimension_numbers<[1], [0], [0], [1], [0, 0, 1, 1], [], []>} : vector<8x128xf32>, vector<128x64xf32>, vector<8x64xf32> -> vector<8x64xf32>
    %c0_37 = arith.constant 0 : index
    %c0_38 = arith.constant 0 : index
    %66 = vector.load %arg11[%c0_37, %c0_38] : memref<1x64xf32, #tpu.memory_space<vmem>>, vector<1x64xf32>
    %67 = vector.broadcast %66 : vector<1x64xf32> to vector<8x64xf32>
    %68 = arith.addf %65, %67 : vector<8x64xf32>
    %cst_39 = arith.constant 5.000000e-01 : f32
    %69 = vector.broadcast %cst_39 : f32 to vector<8x64xf32>
    %70 = arith.mulf %69, %68 : vector<8x64xf32>
    %71 = arith.mulf %68, %68 : vector<8x64xf32>
    %72 = arith.mulf %71, %68 : vector<8x64xf32>
    %cst_40 = arith.constant 4.471500e-02 : f32
    %73 = vector.broadcast %cst_40 : f32 to vector<8x64xf32>
    %74 = arith.mulf %73, %72 : vector<8x64xf32>
    %75 = arith.addf %68, %74 : vector<8x64xf32>
    %cst_41 = arith.constant 0.797884583 : f32
    %76 = vector.broadcast %cst_41 : f32 to vector<8x64xf32>
    %77 = arith.mulf %76, %75 : vector<8x64xf32>
    %78 = math.tanh %77 : vector<8x64xf32>
    %cst_42 = arith.constant 1.000000e+00 : f32
    %79 = vector.broadcast %cst_42 : f32 to vector<8x64xf32>
    %80 = arith.addf %79, %78 : vector<8x64xf32>
    %81 = arith.mulf %70, %80 : vector<8x64xf32>
    %c0_43 = arith.constant 0 : index
    %c0_44 = arith.constant 0 : index
    %82 = vector.load %arg12[%c0_43, %c0_44] : memref<64x1xf32, #tpu.memory_space<vmem>>, vector<64x1xf32>
    %cst_45 = arith.constant dense<0.000000e+00> : vector<8x1xf32>
    %83 = tpu.matmul %81, %82, %cst_45 {dimension_numbers = #tpu.dot_dimension_numbers<[1], [0], [0], [1], [0, 0, 1, 1], [], []>} : vector<8x64xf32>, vector<64x1xf32>, vector<8x1xf32> -> vector<8x1xf32>
    %c0_46 = arith.constant 0 : index
    %c0_47 = arith.constant 0 : index
    %84 = memref.load %arg13[%c0_46, %c0_47] : memref<1x1xf32, #tpu.memory_space<smem>>
    %85 = vector.broadcast %84 : f32 to vector<8x1xf32>
    %86 = arith.addf %83, %85 : vector<8x1xf32>
    %c0_48 = arith.constant 0 : index
    %c0_49 = arith.constant 0 : index
    %87 = vector.load %arg14[%c0_48, %c0_49] : memref<8x1xf32, #tpu.memory_space<vmem>>, vector<8x1xf32>
    tpu.vector_store %arg14[%c0_48, %c0_49], %86 {strides = array<i32>} : memref<8x1xf32, #tpu.memory_space<vmem>>, vector<8x1xf32>,
    return
  }
  func.func @transform_0(%arg0: i32) -> (i32, i32) {
    %c0_i32 = arith.constant 0 : i32
    %c0_i32_0 = arith.constant 0 : i32
    %c0_i32_1 = arith.constant 0 : i32
    return %c0_i32, %c0_i32_0 : i32, i32
  }
  func.func @transform_1(%arg0: i32) -> (i32, i32) {
    %c0_i32 = arith.constant 0 : i32
    %c0_i32_0 = arith.constant 0 : i32
    %c0_i32_1 = arith.constant 0 : i32
    return %c0_i32, %c0_i32_0 : i32, i32
  }
  func.func @transform_2(%arg0: i32) -> (i32, i32, i32) {
    %c0_i32 = arith.constant 0 : i32
    %c0_i32_0 = arith.constant 0 : i32
    %c0_i32_1 = arith.constant 0 : i32
    %c0_i32_2 = arith.constant 0 : i32
    return %c0_i32, %c0_i32_0, %c0_i32_1 : i32, i32, i32
  }
  func.func @transform_3(%arg0: i32) -> (i32, i32) {
    %c0_i32 = arith.constant 0 : i32
    %c0_i32_0 = arith.constant 0 : i32
    %c0_i32_1 = arith.constant 0 : i32
    return %c0_i32, %c0_i32_0 : i32, i32
  }
  func.func @transform_4(%arg0: i32) -> (i32, i32) {
    %c0_i32 = arith.constant 0 : i32
    %c0_i32_0 = arith.constant 0 : i32
    %c0_i32_1 = arith.constant 0 : i32
    return %c0_i32, %c0_i32_0 : i32, i32
  }
  func.func @transform_5(%arg0: i32) -> (i32, i32) {
    %c0_i32 = arith.constant 0 : i32
    %c0_i32_0 = arith.constant 0 : i32
    %c0_i32_1 = arith.constant 0 : i32
    return %c0_i32, %c0_i32_0 : i32, i32
  }
  func.func @transform_6(%arg0: i32) -> (i32, i32) {
    %c0_i32 = arith.constant 0 : i32
    %c0_i32_0 = arith.constant 0 : i32
    %c0_i32_1 = arith.constant 0 : i32
    return %c0_i32, %c0_i32_0 : i32, i32
  }
  func.func @transform_7(%arg0: i32) -> (i32, i32) {
    %c0_i32 = arith.constant 0 : i32
    %c0_i32_0 = arith.constant 0 : i32
    %c0_i32_1 = arith.constant 0 : i32
    return %c0_i32, %c0_i32_0 : i32, i32
  }
  func.func @transform_8(%arg0: i32) -> (i32, i32) {
    %c0_i32 = arith.constant 0 : i32
    %c0_i32_0 = arith.constant 0 : i32
    %c0_i32_1 = arith.constant 0 : i32
    return %c0_i32, %c0_i32_0 : i32, i32
  }
  func.func @transform_9(%arg0: i32) -> (i32, i32) {
    %c0_i32 = arith.constant 0 : i32
    %c0_i32_0 = arith.constant 0 : i32
    %c0_i32_1 = arith.constant 0 : i32
    return %c0_i32, %c0_i32_0 : i32, i32
  }
  func.func @transform_10(%arg0: i32) -> (i32, i32) {
    %c0_i32 = arith.constant 0 : i32
    %c0_i32_0 = arith.constant 0 : i32
    %c0_i32_1 = arith.constant 0 : i32
    return %c0_i32, %c0_i32_0 : i32, i32
  }
  func.func @transform_11(%arg0: i32) -> (i32, i32) {
    %c0_i32 = arith.constant 0 : i32
    %c0_i32_0 = arith.constant 0 : i32
    %c0_i32_1 = arith.constant 0 : i32
    return %c0_i32, %c0_i32_0 : i32, i32
  }
  func.func @transform_12(%arg0: i32) -> (i32, i32) {
    %c0_i32 = arith.constant 0 : i32
    %c0_i32_0 = arith.constant 0 : i32
    %c0_i32_1 = arith.constant 0 : i32
    return %c0_i32, %c0_i32_0 : i32, i32
  }
  func.func @transform_13(%arg0: i32) -> (i32, i32) {
    %c0_i32 = arith.constant 0 : i32
    %c0_i32_0 = arith.constant 0 : i32
    %c0_i32_1 = arith.constant 0 : i32
    return %c0_i32, %c0_i32_0 : i32, i32
  }
}

</mosaic_0001>

<llo_original>
// kernel: tpu_custom_call.1
$region0: #{tpu_custom_call.1}
  #allocation0 [shape = 'u32[]', space=smem, size = 0x4, offset = 0x4, fixed_abs, tag = 'smem constant byte address 0x4 - core index']
  #allocation1 [shape = 'u32[144,128]{1,0:T(1,128)}', space=vmem, size = 0x12000, scoped, tag = 'internal scratch']
  #allocation2 [shape = 'f32[1,1]{1,0:T(1,128)S(6)}', space=smem, size = 0x200, scoped, tag = 'scoped memory for tpu_custom_call.1']
  %s0 = inlined_call_operand.vmem [shape: f32[8,64], index: 0, kind: input, shape index: {}]
  %s1 = inlined_call_operand.hbm [shape: f32[8,64], index: 1, kind: input, shape index: {}]
  %s2 = inlined_call_operand.hbm [shape: f32[8,8,64], index: 2, kind: input, shape index: {}]
  %s3 = inlined_call_operand.hbm [shape: f32[64,256], index: 3, kind: input, shape index: {}]
  %s4 = inlined_call_operand.hbm [shape: f32[64,256], index: 4, kind: input, shape index: {}]
  %s5 = inlined_call_operand.hbm [shape: f32[64,256], index: 5, kind: input, shape index: {}]
  %s6 = inlined_call_operand.vmem [shape: f32[1,256], index: 6, kind: input, shape index: {}]
  %s7 = inlined_call_operand.vmem [shape: f32[256,128], index: 7, kind: input, shape index: {}]
  %s8 = inlined_call_operand.vmem [shape: f32[1,128], index: 8, kind: input, shape index: {}]
  %s9 = inlined_call_operand.vmem [shape: f32[128,64], index: 9, kind: input, shape index: {}]
  %s10 = inlined_call_operand.vmem [shape: f32[1,64], index: 10, kind: input, shape index: {}]
  %s11 = inlined_call_operand.vmem [shape: f32[64,1], index: 11, kind: input, shape index: {}]
  %s12 = inlined_call_operand.<no memory space> [shape: f32[1,1], index: 12, kind: input, shape index: {}]
  %s13 = inlined_call_operand.vmem [shape: f32[8,1], index: 13, kind: output, shape index: {}]
  %s14 = sld [smem:[#allocation0]]
  $region82: #{tpu_custom_call.1} parent=0
    _
  %s16 = ssub.s32 1, %s14
  %s17 = scalar_select 0, %s16, %s14
  %18 = sst [smem:[#allocation2]] %s12
  $region1: #{tpu_custom_call.1} parent=0
    #allocation3 [shape = 'u8[4096]{0}', space=vmem, size = 0x1000, scoped, tag = 'input window, operand 1, single buffered']
    #allocation4 [shape = 's32[1]{0}', space=sflag, size = 0x4, scoped, tag = 'scoped memory for tpu_custom_call.1']
    #allocation5 [shape = 'u8[32768]{0}', space=vmem, size = 0x8000, scoped, tag = 'input window, operand 2, single buffered']
    #allocation6 [shape = 's32[1]{0}', space=sflag, size = 0x4, scoped, tag = 'scoped memory for tpu_custom_call.1']
    #allocation7 [shape = 'u8[65536]{0}', space=vmem, size = 0x10000, scoped, tag = 'input window, operand 3, single buffered']
    #allocation8 [shape = 'u8[65536]{0}', space=vmem, size = 0x10000, scoped, tag = 'input window, operand 4, single buffered']
    #allocation9 [shape = 's32[1]{0}', space=sflag, size = 0x4, scoped, tag = 'scoped memory for tpu_custom_call.1']
    #allocation10 [shape = 'u8[65536]{0}', space=vmem, size = 0x10000, scoped, tag = 'input window, operand 5, single buffered']
    %19 = vsyncpa [#allocation4], 0
    %20 = vsyncpa [#allocation6], 0
    %21 = vsyncpa [#allocation9], 0
    // Predicated region
    $region2: #{tpu_custom_call.1} parent=1 // pred_check
      _
    $region3: #{tpu_custom_call.1} parent=1 // pred_check_branch
      %23 = sbr.rel (0) target = $region5
    $region4: #{tpu_custom_call.1} parent=1 // pred_region
      _
    $region5: #{tpu_custom_call.1} parent=1 // pred_fallthru
      _
    // Predicated region
    $region6: #{tpu_custom_call.1} parent=1 // pred_check
      _
    $region7: #{tpu_custom_call.1} parent=1 // pred_check_branch
      %25 = sbr.rel (0) target = $region9
    $region8: #{tpu_custom_call.1} parent=1 // pred_region
      %s27 = ssub.s32 128, 128
      %28 = vsyncadd [#allocation4], %s27
      %s30 = sshll.u32 [#allocation3], 4
      %s31 = int_to_ptr.vmem [resolvable:$true] %s30
      %33 = dma.hbm_to_vmem [thread:$0]  %s1, 128, %s31, [#allocation4]
    $region9: #{tpu_custom_call.1} parent=1 // pred_fallthru
      _
    // Predicated region
    $region10: #{tpu_custom_call.1} parent=1 // pred_check
      _
    $region11: #{tpu_custom_call.1} parent=1 // pred_check_branch
      %35 = sbr.rel (0) target = $region13
    $region12: #{tpu_custom_call.1} parent=1 // pred_region
      %s37 = ssub.s32 1024, 1024
      %38 = vsyncadd [#allocation6], %s37
      %s39 = sshll.u32 [#allocation5], 4
      %s40 = int_to_ptr.vmem [resolvable:$true] %s39
      %45 = dma.hbm_to_vmem [thread:$0]  %s2, 1024, %s40, [#allocation6], 128, 128, 8
    $region13: #{tpu_custom_call.1} parent=1 // pred_fallthru
      _
    // Predicated region
    $region14: #{tpu_custom_call.1} parent=1 // pred_check
      _
    $region15: #{tpu_custom_call.1} parent=1 // pred_check_branch
      %47 = sbr.rel (0) target = $region17
    $region16: #{tpu_custom_call.1} parent=1 // pred_region
      %s49 = ssub.s32 2048, 2048
      %50 = vsyncadd [#allocation6], %s49
      %s51 = sshll.u32 [#allocation7], 4
      %s52 = int_to_ptr.vmem [resolvable:$true] %s51
      %57 = dma.hbm_to_vmem [thread:$0]  %s3, 2048, %s52, [#allocation6], 256, 256, 16
    $region17: #{tpu_custom_call.1} parent=1 // pred_fallthru
      _
    // Predicated region
    $region18: #{tpu_custom_call.1} parent=1 // pred_check
      _
    $region19: #{tpu_custom_call.1} parent=1 // pred_check_branch
      %59 = sbr.rel (0) target = $region21
    $region20: #{tpu_custom_call.1} parent=1 // pred_region
      %s61 = ssub.s32 2048, 2048
      %62 = vsyncadd [#allocation9], %s61
      %s63 = sshll.u32 [#allocation8], 4
      %s64 = int_to_ptr.vmem [resolvable:$true] %s63
      %69 = dma.hbm_to_vmem [thread:$0]  %s4, 2048, %s64, [#allocation9], 256, 256, 16
    $region21: #{tpu_custom_call.1} parent=1 // pred_fallthru
      _
    // Predicated region
    $region22: #{tpu_custom_call.1} parent=1 // pred_check
      _
    $region23: #{tpu_custom_call.1} parent=1 // pred_check_branch
      %71 = sbr.rel (0) target = $region25
    $region24: #{tpu_custom_call.1} parent=1 // pred_region
      %s73 = ssub.s32 2048, 2048
      %74 = vsyncadd [#allocation9], %s73
      %s75 = sshll.u32 [#allocation10], 4
      %s76 = int_to_ptr.vmem [resolvable:$true] %s75
      %81 = dma.hbm_to_vmem [thread:$0]  %s5, 2048, %s76, [#allocation9], 256, 256, 16
    $region25: #{tpu_custom_call.1} parent=1 // pred_fallthru
      _
    // Predicated region
    $region26: #{tpu_custom_call.1} parent=1 // pred_check
      _
    $region27: #{tpu_custom_call.1} parent=1 // pred_check_branch
      %83 = sbr.rel (0) target = $region29
    $region28: #{tpu_custom_call.1} parent=1 // pred_region
      _
    $region29: #{tpu_custom_call.1} parent=1 // pred_fallthru
      _
    // Predicated region
    $region30: #{tpu_custom_call.1} parent=1 // pred_check
      _
    $region31: #{tpu_custom_call.1} parent=1 // pred_check_branch
      %85 = sbr.rel (0) target = $region33
    $region32: #{tpu_custom_call.1} parent=1 // pred_region
      _
    $region33: #{tpu_custom_call.1} parent=1 // pred_fallthru
      _
    // Predicated region
    $region34: #{tpu_custom_call.1} parent=1 // pred_check
      _
    $region35: #{tpu_custom_call.1} parent=1 // pred_check_branch
      %87 = sbr.rel (0) target = $region37
    $region36: #{tpu_custom_call.1} parent=1 // pred_region
      _
    $region37: #{tpu_custom_call.1} parent=1 // pred_fallthru
      _
    // Predicated region
    $region38: #{tpu_custom_call.1} parent=1 // pred_check
      _
    $region39: #{tpu_custom_call.1} parent=1 // pred_check_branch
      %89 = sbr.rel (0) target = $region41
    $region40: #{tpu_custom_call.1} parent=1 // pred_region
      _
    $region41: #{tpu_custom_call.1} parent=1 // pred_fallthru
      _
    // Predicated region
    $region42: #{tpu_custom_call.1} parent=1 // pred_check
      _
    $region43: #{tpu_custom_call.1} parent=1 // pred_check_branch
      %91 = sbr.rel (0) target = $region45
    $region44: #{tpu_custom_call.1} parent=1 // pred_region
      _
    $region45: #{tpu_custom_call.1} parent=1 // pred_fallthru
      _
    // Predicated region
    $region46: #{tpu_custom_call.1} parent=1 // pred_check
      _
    $region47: #{tpu_custom_call.1} parent=1 // pred_check_branch
      %93 = sbr.rel (0) target = $region49
    $region48: #{tpu_custom_call.1} parent=1 // pred_region
      _
    $region49: #{tpu_custom_call.1} parent=1 // pred_fallthru
      _
    // Predicated region
    $region50: #{tpu_custom_call.1} parent=1 // pred_check
      _
    $region51: #{tpu_custom_call.1} parent=1 // pred_check_branch
      %95 = sbr.rel (0) target = $region53
    $region52: #{tpu_custom_call.1} parent=1 // pred_region
      _
    $region53: #{tpu_custom_call.1} parent=1 // pred_fallthru
      _
    // Predicated region
    $region54: #{tpu_custom_call.1} parent=1 // pred_check
      _
    $region55: #{tpu_custom_call.1} parent=1 // pred_check_branch
      %97 = sbr.rel (0) target = $region57
    $region56: #{tpu_custom_call.1} parent=1 // pred_region
      %98 = dma.done [#allocation4], 128
    $region57: #{tpu_custom_call.1} parent=1 // pred_fallthru
      _
    // Predicated region
    $region58: #{tpu_custom_call.1} parent=1 // pred_check
      _
    $region59: #{tpu_custom_call.1} parent=1 // pred_check_branch
      %100 = sbr.rel (0) target = $region61
    $region60: #{tpu_custom_call.1} parent=1 // pred_region
      %101 = dma.done [#allocation6], 1024
    $region61: #{tpu_custom_call.1} parent=1 // pred_fallthru
      _
    // Predicated region
    $region62: #{tpu_custom_call.1} parent=1 // pred_check
      _
    $region63: #{tpu_custom_call.1} parent=1 // pred_check_branch
      %103 = sbr.rel (0) target = $region65
    $region64: #{tpu_custom_call.1} parent=1 // pred_region
      %104 = dma.done [#allocation6], 2048
    $region65: #{tpu_custom_call.1} parent=1 // pred_fallthru
      _
    // Predicated region
    $region66: #{tpu_custom_call.1} parent=1 // pred_check
      _
    $region67: #{tpu_custom_call.1} parent=1 // pred_check_branch
      %106 = sbr.rel (0) target = $region69
    $region68: #{tpu_custom_call.1} parent=1 // pred_region
      %107 = dma.done [#allocation9], 2048
    $region69: #{tpu_custom_call.1} parent=1 // pred_fallthru
      _
    // Predicated region
    $region70: #{tpu_custom_call.1} parent=1 // pred_check
      _
    $region71: #{tpu_custom_call.1} parent=1 // pred_check_branch
      %109 = sbr.rel (0) target = $region73
    $region72: #{tpu_custom_call.1} parent=1 // pred_region
      %110 = dma.done [#allocation9], 2048
    $region73: #{tpu_custom_call.1} parent=1 // pred_fallthru
      _
    %v111 = vld [vmem:[%s0] sm:$0xff]
    %v112 = vld [vmem:[#allocation3] sm:$0xff]
    %v113 = vld [vmem:[#allocation5] sm:$0xff]
    %v114 = vld [vmem:[#allocation5 + $0x8] sm:$0xff]
    %v115 = vld [vmem:[#allocation5 + $0x10] sm:$0xff]
    %v116 = vld [vmem:[#allocation5 + $0x18] sm:$0xff]
    %v117 = vld [vmem:[#allocation5 + $0x20] sm:$0xff]
    %v118 = vld [vmem:[#allocation5 + $0x28] sm:$0xff]
    %v119 = vld [vmem:[#allocation5 + $0x30] sm:$0xff]
    %v120 = vld [vmem:[#allocation5 + $0x38] sm:$0xff]
    %v122 = vcombine.high %v112, %v112
    %v124 = vunpack.c.l.s4 1966171168
    %v125 = vunpack.c.0.s8 %v124
    %v126 = vlaneseq
    %v127 = vshrl.u32 %v126, 7
    %v128 = vsub.s32 %v125, %v127
    %v129 = vrot.slane %v112, %v128
    %v131 = vunpack.c.l.s4 1966171168
    %v132 = vunpack.c.0.s8 %v131
    %v133 = vlaneseq
    %v134 = vshrl.u32 %v133, 7
    %v135 = vsub.s32 %v132, %v134
    %v136 = vrot.slane %v122, %v135
    %v137 = vcombine.high %v129, %v129
    %v138 = vcombine.high %v136, %v136
    %v140 = vunpack.c.l.s4 1966171168
    %v141 = vunpack.c.0.s8 %v140
    %v142 = vlaneseq
    %v143 = vshrl.u32 %v142, 7
    %v144 = vsub.s32 %v141, %v143
    %v145 = vrot.slane %v129, %v144
    %v147 = vunpack.c.l.s4 1966171168
    %v148 = vunpack.c.0.s8 %v147
    %v149 = vlaneseq
    %v150 = vshrl.u32 %v149, 7
    %v151 = vsub.s32 %v148, %v150
    %v152 = vrot.slane %v136, %v151
    %v154 = vunpack.c.l.s4 1966171168
    %v155 = vunpack.c.0.s8 %v154
    %v156 = vlaneseq
    %v157 = vshrl.u32 %v156, 7
    %v158 = vsub.s32 %v155, %v157
    %v159 = vrot.slane %v137, %v158
    %v161 = vunpack.c.l.s4 1966171168
    %v162 = vunpack.c.0.s8 %v161
    %v163 = vlaneseq
    %v164 = vshrl.u32 %v163, 7
    %v165 = vsub.s32 %v162, %v164
    %v166 = vrot.slane %v138, %v165
    %v167 = vcombine.high %v145, %v145
    %v168 = vcombine.high %v152, %v152
    %v169 = vcombine.high %v159, %v159
    %v170 = vcombine.high %v166, %v166
    %vm171 = vcmask 523264
    %v172 = vsel %vm171, %v145, 0
    %v175 = vsel %vm171, %v113, 0
    %177 = vmatprep.subr.mxu0 0.0
    %178 = vmatpush1.xpose.msra.mxu0 0.0
    %179 = vmatprep.subr.mxu0 0.0
    %180 = vmatpush1.xpose.msra.mxu0 0.0
    %181 = vmatprep.subr.mxu0 0.0
    %182 = vmatpush1.xpose.msra.mxu0 0.0
    %183 = vmatprep.subr.mxu0 0.0
    %184 = vmatpush1.xpose.msra.mxu0 0.0
    %185 = vmatprep.subr.mxu0 0.0
    %186 = vmatpush1.xpose.msra.mxu0 0.0
    %187 = vmatprep.subr.mxu0 0.0
    %188 = vmatpush1.xpose.msra.mxu0 0.0
    %189 = vmatprep.subr.mxu0 0.0
    %190 = vmatpush1.xpose.msra.mxu0 0.0
    %191 = vmatprep.subr.mxu0 0.0
    %192 = vmatpush1.xpose.msra.mxu0 0.0
    %193 = vmatprep.subr.mxu0 0.0
    %194 = vmatpush1.xpose.msra.mxu0 0.0
    %195 = vmatprep.subr.mxu0 0.0
    %196 = vmatpush1.xpose.msra.mxu0 0.0
    %197 = vmatprep.subr.mxu0 0.0
    %198 = vmatpush1.xpose.msra.mxu0 0.0
    %199 = vmatprep.subr.mxu0 0.0
    %200 = vmatpush1.xpose.msra.mxu0 0.0
    %201 = vmatprep.subr.mxu0 0.0
    %202 = vmatpush1.xpose.msra.mxu0 0.0
    %203 = vmatprep.subr.mxu0 0.0
    %204 = vmatpush1.xpose.msra.mxu0 0.0
    %205 = vmatprep.subr.mxu0 0.0
    %206 = vmatpush1.xpose.msra.mxu0 0.0
    %207 = vmatprep.subr.mxu0 0.0
    %208 = vmatpush1.xpose.msra.mxu0 %v175
    %209 = vmatprep.subr.mxu0 0.0
    %210 = vmatpush2.xpose.msra.mxu0 0.0
    %211 = vmatprep.subr.mxu0 0.0
    %212 = vmatpush2.xpose.msra.mxu0 0.0
    %213 = vmatprep.subr.mxu0 0.0
    %214 = vmatpush2.xpose.msra.mxu0 0.0
    %215 = vmatprep.subr.mxu0 0.0
    %216 = vmatpush2.xpose.msra.mxu0 0.0
    %217 = vmatprep.subr.mxu0 0.0
    %218 = vmatpush2.xpose.msra.mxu0 0.0
    %219 = vmatprep.subr.mxu0 0.0
    %220 = vmatpush2.xpose.msra.mxu0 0.0
    %221 = vmatprep.subr.mxu0 0.0
    %222 = vmatpush2.xpose.msra.mxu0 0.0
    %223 = vmatprep.subr.mxu0 0.0
    %224 = vmatpush2.xpose.msra.mxu0 0.0
    %225 = vmatprep.subr.mxu0 0.0
    %226 = vmatpush2.xpose.msra.mxu0 0.0
    %227 = vmatprep.subr.mxu0 0.0
    %228 = vmatpush2.xpose.msra.mxu0 0.0
    %229 = vmatprep.subr.mxu0 0.0
    %230 = vmatpush2.xpose.msra.mxu0 0.0
    %231 = vmatprep.subr.mxu0 0.0
    %232 = vmatpush2.xpose.msra.mxu0 0.0
    %233 = vmatprep.subr.mxu0 0.0
    %234 = vmatpush2.xpose.msra.mxu0 0.0
    %235 = vmatprep.subr.mxu0 0.0
    %236 = vmatpush2.xpose.msra.mxu0 0.0
    %237 = vmatprep.subr.mxu0 0.0
    %238 = vmatpush2.xpose.msra.mxu0 0.0
    %239 = vmatprep.subr.mxu0 0.0
    %240 = vmatpush2.xpose.msra.mxu0 0.0
    %241 = vmatprep.mubr.f32.mxu0 0.0
    %242 = vmatmul.mubr.f32.gmra.mxu0 %v172
    %v243 = vpop.f32.mrf.mxu0
    %v244 = vadd.f32 0.0, %v243
    %v245 = vpop.f32.mrf.mxu0
    %246 = vdwg.mxu0
    %v247 = vsel %vm171, %v159, 0
    %v250 = vsel %vm171, %v114, 0
    %252 = vmatprep.subr.mxu0 0.0
    %253 = vmatpush1.xpose.msra.mxu0 0.0
    %254 = vmatprep.subr.mxu0 0.0
    %255 = vmatpush1.xpose.msra.mxu0 0.0
    %256 = vmatprep.subr.mxu0 0.0
    %257 = vmatpush1.xpose.msra.mxu0 0.0
    %258 = vmatprep.subr.mxu0 0.0
    %259 = vmatpush1.xpose.msra.mxu0 0.0
    %260 = vmatprep.subr.mxu0 0.0
    %261 = vmatpush1.xpose.msra.mxu0 0.0
    %262 = vmatprep.subr.mxu0 0.0
    %263 = vmatpush1.xpose.msra.mxu0 0.0
    %264 = vmatprep.subr.mxu0 0.0
    %265 = vmatpush1.xpose.msra.mxu0 0.0
    %266 = vmatprep.subr.mxu0 0.0
    %267 = vmatpush1.xpose.msra.mxu0 0.0
    %268 = vmatprep.subr.mxu0 0.0
    %269 = vmatpush1.xpose.msra.mxu0 0.0
    %270 = vmatprep.subr.mxu0 0.0
    %271 = vmatpush1.xpose.msra.mxu0 0.0
    %272 = vmatprep.subr.mxu0 0.0
    %273 = vmatpush1.xpose.msra.mxu0 0.0
    %274 = vmatprep.subr.mxu0 0.0
    %275 = vmatpush1.xpose.msra.mxu0 0.0
    %276 = vmatprep.subr.mxu0 0.0
    %277 = vmatpush1.xpose.msra.mxu0 0.0
    %278 = vmatprep.subr.mxu0 0.0
    %279 = vmatpush1.xpose.msra.mxu0 0.0
    %280 = vmatprep.subr.mxu0 0.0
    %281 = vmatpush1.xpose.msra.mxu0 0.0
    %282 = vmatprep.subr.mxu0 0.0
    %283 = vmatpush1.xpose.msra.mxu0 %v250
    %284 = vmatprep.subr.mxu0 0.0
    %285 = vmatpush2.xpose.msra.mxu0 0.0
    %286 = vmatprep.subr.mxu0 0.0
    %287 = vmatpush2.xpose.msra.mxu0 0.0
    %288 = vmatprep.subr.mxu0 0.0
    %289 = vmatpush2.xpose.msra.mxu0 0.0
    %290 = vmatprep.subr.mxu0 0.0
    %291 = vmatpush2.xpose.msra.mxu0 0.0
    %292 = vmatprep.subr.mxu0 0.0
    %293 = vmatpush2.xpose.msra.mxu0 0.0
    %294 = vmatprep.subr.mxu0 0.0
    %295 = vmatpush2.xpose.msra.mxu0 0.0
    %296 = vmatprep.subr.mxu0 0.0
    %297 = vmatpush2.xpose.msra.mxu0 0.0
    %298 = vmatprep.subr.mxu0 0.0
    %299 = vmatpush2.xpose.msra.mxu0 0.0
    %300 = vmatprep.subr.mxu0 0.0
    %301 = vmatpush2.xpose.msra.mxu0 0.0
    %302 = vmatprep.subr.mxu0 0.0
    %303 = vmatpush2.xpose.msra.mxu0 0.0
    %304 = vmatprep.subr.mxu0 0.0
    %305 = vmatpush2.xpose.msra.mxu0 0.0
    %306 = vmatprep.subr.mxu0 0.0
    %307 = vmatpush2.xpose.msra.mxu0 0.0
    %308 = vmatprep.subr.mxu0 0.0
    %309 = vmatpush2.xpose.msra.mxu0 0.0
    %310 = vmatprep.subr.mxu0 0.0
    %311 = vmatpush2.xpose.msra.mxu0 0.0
    %312 = vmatprep.subr.mxu0 0.0
    %313 = vmatpush2.xpose.msra.mxu0 0.0
    %314 = vmatprep.subr.mxu0 0.0
    %315 = vmatpush2.xpose.msra.mxu0 0.0
    %316 = vmatprep.mubr.f32.mxu0 0.0
    %317 = vmatmul.mubr.f32.gmra.mxu0 %v247
    %v318 = vpop.f32.mrf.mxu0
    %v319 = vadd.f32 0.0, %v318
    %v320 = vpop.f32.mrf.mxu0
    %321 = vdwg.mxu0
    %v322 = vsel %vm171, %v167, 0
    %v325 = vsel %vm171, %v115, 0
    %327 = vmatprep.subr.mxu0 0.0
    %328 = vmatpush1.xpose.msra.mxu0 0.0
    %329 = vmatprep.subr.mxu0 0.0
    %330 = vmatpush1.xpose.msra.mxu0 0.0
    %331 = vmatprep.subr.mxu0 0.0
    %332 = vmatpush1.xpose.msra.mxu0 0.0
    %333 = vmatprep.subr.mxu0 0.0
    %334 = vmatpush1.xpose.msra.mxu0 0.0
    %335 = vmatprep.subr.mxu0 0.0
    %336 = vmatpush1.xpose.msra.mxu0 0.0
    %337 = vmatprep.subr.mxu0 0.0
    %338 = vmatpush1.xpose.msra.mxu0 0.0
    %339 = vmatprep.subr.mxu0 0.0
    %340 = vmatpush1.xpose.msra.mxu0 0.0
    %341 = vmatprep.subr.mxu0 0.0
    %342 = vmatpush1.xpose.msra.mxu0 0.0
    %343 = vmatprep.subr.mxu0 0.0
    %344 = vmatpush1.xpose.msra.mxu0 0.0
    %345 = vmatprep.subr.mxu0 0.0
    %346 = vmatpush1.xpose.msra.mxu0 0.0
    %347 = vmatprep.subr.mxu0 0.0
    %348 = vmatpush1.xpose.msra.mxu0 0.0
    %349 = vmatprep.subr.mxu0 0.0
    %350 = vmatpush1.xpose.msra.mxu0 0.0
    %351 = vmatprep.subr.mxu0 0.0
    %352 = vmatpush1.xpose.msra.mxu0 0.0
    %353 = vmatprep.subr.mxu0 0.0
    %354 = vmatpush1.xpose.msra.mxu0 0.0
    %355 = vmatprep.subr.mxu0 0.0
    %356 = vmatpush1.xpose.msra.mxu0 0.0
    %357 = vmatprep.subr.mxu0 0.0
    %358 = vmatpush1.xpose.msra.mxu0 %v325
    %359 = vmatprep.subr.mxu0 0.0
    %360 = vmatpush2.xpose.msra.mxu0 0.0
    %361 = vmatprep.subr.mxu0 0.0
    %362 = vmatpush2.xpose.msra.mxu0 0.0
    %363 = vmatprep.subr.mxu0 0.0
    %364 = vmatpush2.xpose.msra.mxu0 0.0
    %365 = vmatprep.subr.mxu0 0.0
    %366 = vmatpush2.xpose.msra.mxu0 0.0
    %367 = vmatprep.subr.mxu0 0.0
    %368 = vmatpush2.xpose.msra.mxu0 0.0
    %369 = vmatprep.subr.mxu0 0.0
    %370 = vmatpush2.xpose.msra.mxu0 0.0
    %371 = vmatprep.subr.mxu0 0.0
    %372 = vmatpush2.xpose.msra.mxu0 0.0
    %373 = vmatprep.subr.mxu0 0.0
    %374 = vmatpush2.xpose.msra.mxu0 0.0
    %375 = vmatprep.subr.mxu0 0.0
    %376 = vmatpush2.xpose.msra.mxu0 0.0
    %377 = vmatprep.subr.mxu0 0.0
    %378 = vmatpush2.xpose.msra.mxu0 0.0
    %379 = vmatprep.subr.mxu0 0.0
    %380 = vmatpush2.xpose.msra.mxu0 0.0
    %381 = vmatprep.subr.mxu0 0.0
    %382 = vmatpush2.xpose.msra.mxu0 0.0
    %383 = vmatprep.subr.mxu0 0.0
    %384 = vmatpush2.xpose.msra.mxu0 0.0
    %385 = vmatprep.subr.mxu0 0.0
    %386 = vmatpush2.xpose.msra.mxu0 0.0
    %387 = vmatprep.subr.mxu0 0.0
    %388 = vmatpush2.xpose.msra.mxu0 0.0
    %389 = vmatprep.subr.mxu0 0.0
    %390 = vmatpush2.xpose.msra.mxu0 0.0
    %391 = vmatprep.mubr.f32.mxu0 0.0
    %392 = vmatmul.mubr.f32.gmra.mxu0 %v322
    %v393 = vpop.f32.mrf.mxu0
    %v394 = vadd.f32 0.0, %v393
    %v395 = vpop.f32.mrf.mxu0
    %396 = vdwg.mxu0
    %v397 = vsel %vm171, %v169, 0
    %v400 = vsel %vm171, %v116, 0
    %402 = vmatprep.subr.mxu0 0.0
    %403 = vmatpush1.xpose.msra.mxu0 0.0
    %404 = vmatprep.subr.mxu0 0.0
    %405 = vmatpush1.xpose.msra.mxu0 0.0
    %406 = vmatprep.subr.mxu0 0.0
    %407 = vmatpush1.xpose.msra.mxu0 0.0
    %408 = vmatprep.subr.mxu0 0.0
    %409 = vmatpush1.xpose.msra.mxu0 0.0
    %410 = vmatprep.subr.mxu0 0.0
    %411 = vmatpush1.xpose.msra.mxu0 0.0
    %412 = vmatprep.subr.mxu0 0.0
    %413 = vmatpush1.xpose.msra.mxu0 0.0
    %414 = vmatprep.subr.mxu0 0.0
    %415 = vmatpush1.xpose.msra.mxu0 0.0
    %416 = vmatprep.subr.mxu0 0.0
    %417 = vmatpush1.xpose.msra.mxu0 0.0
    %418 = vmatprep.subr.mxu0 0.0
    %419 = vmatpush1.xpose.msra.mxu0 0.0
    %420 = vmatprep.subr.mxu0 0.0
    %421 = vmatpush1.xpose.msra.mxu0 0.0
    %422 = vmatprep.subr.mxu0 0.0
    %423 = vmatpush1.xpose.msra.mxu0 0.0
    %424 = vmatprep.subr.mxu0 0.0
    %425 = vmatpush1.xpose.msra.mxu0 0.0
    %426 = vmatprep.subr.mxu0 0.0
    %427 = vmatpush1.xpose.msra.mxu0 0.0
    %428 = vmatprep.subr.mxu0 0.0
    %429 = vmatpush1.xpose.msra.mxu0 0.0
    %430 = vmatprep.subr.mxu0 0.0
    %431 = vmatpush1.xpose.msra.mxu0 0.0
    %432 = vmatprep.subr.mxu0 0.0
    %433 = vmatpush1.xpose.msra.mxu0 %v400
    %434 = vmatprep.subr.mxu0 0.0
    %435 = vmatpush2.xpose.msra.mxu0 0.0
    %436 = vmatprep.subr.mxu0 0.0
    %437 = vmatpush2.xpose.msra.mxu0 0.0
    %438 = vmatprep.subr.mxu0 0.0
    %439 = vmatpush2.xpose.msra.mxu0 0.0
    %440 = vmatprep.subr.mxu0 0.0
    %441 = vmatpush2.xpose.msra.mxu0 0.0
    %442 = vmatprep.subr.mxu0 0.0
    %443 = vmatpush2.xpose.msra.mxu0 0.0
    %444 = vmatprep.subr.mxu0 0.0
    %445 = vmatpush2.xpose.msra.mxu0 0.0
    %446 = vmatprep.subr.mxu0 0.0
    %447 = vmatpush2.xpose.msra.mxu0 0.0
    %448 = vmatprep.subr.mxu0 0.0
    %449 = vmatpush2.xpose.msra.mxu0 0.0
    %450 = vmatprep.subr.mxu0 0.0
    %451 = vmatpush2.xpose.msra.mxu0 0.0
    %452 = vmatprep.subr.mxu0 0.0
    %453 = vmatpush2.xpose.msra.mxu0 0.0
    %454 = vmatprep.subr.mxu0 0.0
    %455 = vmatpush2.xpose.msra.mxu0 0.0
    %456 = vmatprep.subr.mxu0 0.0
    %457 = vmatpush2.xpose.msra.mxu0 0.0
    %458 = vmatprep.subr.mxu0 0.0
    %459 = vmatpush2.xpose.msra.mxu0 0.0
    %460 = vmatprep.subr.mxu0 0.0
    %461 = vmatpush2.xpose.msra.mxu0 0.0
    %462 = vmatprep.subr.mxu0 0.0
    %463 = vmatpush2.xpose.msra.mxu0 0.0
    %464 = vmatprep.subr.mxu0 0.0
    %465 = vmatpush2.xpose.msra.mxu0 0.0
    %466 = vmatprep.mubr.f32.mxu0 0.0
    %467 = vmatmul.mubr.f32.gmra.mxu0 %v397
    %v468 = vpop.f32.mrf.mxu0
    %v469 = vadd.f32 0.0, %v468
    %v470 = vpop.f32.mrf.mxu0
    %471 = vdwg.mxu0
    %v472 = vsel %vm171, %v152, 0
    %v475 = vsel %vm171, %v117, 0
    %477 = vmatprep.subr.mxu0 0.0
    %478 = vmatpush1.xpose.msra.mxu0 0.0
    %479 = vmatprep.subr.mxu0 0.0
    %480 = vmatpush1.xpose.msra.mxu0 0.0
    %481 = vmatprep.subr.mxu0 0.0
    %482 = vmatpush1.xpose.msra.mxu0 0.0
    %483 = vmatprep.subr.mxu0 0.0
    %484 = vmatpush1.xpose.msra.mxu0 0.0
    %485 = vmatprep.subr.mxu0 0.0
    %486 = vmatpush1.xpose.msra.mxu0 0.0
    %487 = vmatprep.subr.mxu0 0.0
    %488 = vmatpush1.xpose.msra.mxu0 0.0
    %489 = vmatprep.subr.mxu0 0.0
    %490 = vmatpush1.xpose.msra.mxu0 0.0
    %491 = vmatprep.subr.mxu0 0.0
    %492 = vmatpush1.xpose.msra.mxu0 0.0
    %493 = vmatprep.subr.mxu0 0.0
    %494 = vmatpush1.xpose.msra.mxu0 0.0
    %495 = vmatprep.subr.mxu0 0.0
    %496 = vmatpush1.xpose.msra.mxu0 0.0
    %497 = vmatprep.subr.mxu0 0.0
    %498 = vmatpush1.xpose.msra.mxu0 0.0
    %499 = vmatprep.subr.mxu0 0.0
    %500 = vmatpush1.xpose.msra.mxu0 0.0
    %501 = vmatprep.subr.mxu0 0.0
    %502 = vmatpush1.xpose.msra.mxu0 0.0
    %503 = vmatprep.subr.mxu0 0.0
    %504 = vmatpush1.xpose.msra.mxu0 0.0
    %505 = vmatprep.subr.mxu0 0.0
    %506 = vmatpush1.xpose.msra.mxu0 0.0
    %507 = vmatprep.subr.mxu0 0.0
    %508 = vmatpush1.xpose.msra.mxu0 %v475
    %509 = vmatprep.subr.mxu0 0.0
    %510 = vmatpush2.xpose.msra.mxu0 0.0
    %511 = vmatprep.subr.mxu0 0.0
    %512 = vmatpush2.xpose.msra.mxu0 0.0
    %513 = vmatprep.subr.mxu0 0.0
    %514 = vmatpush2.xpose.msra.mxu0 0.0
    %515 = vmatprep.subr.mxu0 0.0
    %516 = vmatpush2.xpose.msra.mxu0 0.0
    %517 = vmatprep.subr.mxu0 0.0
    %518 = vmatpush2.xpose.msra.mxu0 0.0
    %519 = vmatprep.subr.mxu0 0.0
    %520 = vmatpush2.xpose.msra.mxu0 0.0
    %521 = vmatprep.subr.mxu0 0.0
    %522 = vmatpush2.xpose.msra.mxu0 0.0
    %523 = vmatprep.subr.mxu0 0.0
    %524 = vmatpush2.xpose.msra.mxu0 0.0
    %525 = vmatprep.subr.mxu0 0.0
    %526 = vmatpush2.xpose.msra.mxu0 0.0
    %527 = vmatprep.subr.mxu0 0.0
    %528 = vmatpush2.xpose.msra.mxu0 0.0
    %529 = vmatprep.subr.mxu0 0.0
    %530 = vmatpush2.xpose.msra.mxu0 0.0
    %531 = vmatprep.subr.mxu0 0.0
    %532 = vmatpush2.xpose.msra.mxu0 0.0
    %533 = vmatprep.subr.mxu0 0.0
    %534 = vmatpush2.xpose.msra.mxu0 0.0
    %535 = vmatprep.subr.mxu0 0.0
    %536 = vmatpush2.xpose.msra.mxu0 0.0
    %537 = vmatprep.subr.mxu0 0.0
    %538 = vmatpush2.xpose.msra.mxu0 0.0
    %539 = vmatprep.subr.mxu0 0.0
    %540 = vmatpush2.xpose.msra.mxu0 0.0
    %541 = vmatprep.mubr.f32.mxu0 0.0
    %542 = vmatmul.mubr.f32.gmra.mxu0 %v472
    %v543 = vpop.f32.mrf.mxu0
    %v544 = vadd.f32 0.0, %v543
    %v545 = vpop.f32.mrf.mxu0
    %546 = vdwg.mxu0
    %v547 = vsel %vm171, %v166, 0
    %v550 = vsel %vm171, %v118, 0
    %552 = vmatprep.subr.mxu0 0.0
    %553 = vmatpush1.xpose.msra.mxu0 0.0
    %554 = vmatprep.subr.mxu0 0.0
    %555 = vmatpush1.xpose.msra.mxu0 0.0
    %556 = vmatprep.subr.mxu0 0.0
    %557 = vmatpush1.xpose.msra.mxu0 0.0
    %558 = vmatprep.subr.mxu0 0.0
    %559 = vmatpush1.xpose.msra.mxu0 0.0
    %560 = vmatprep.subr.mxu0 0.0
    %561 = vmatpush1.xpose.msra.mxu0 0.0
    %562 = vmatprep.subr.mxu0 0.0
    %563 = vmatpush1.xpose.msra.mxu0 0.0
    %564 = vmatprep.subr.mxu0 0.0
    %565 = vmatpush1.xpose.msra.mxu0 0.0
    %566 = vmatprep.subr.mxu0 0.0
    %567 = vmatpush1.xpose.msra.mxu0 0.0
    %568 = vmatprep.subr.mxu0 0.0
    %569 = vmatpush1.xpose.msra.mxu0 0.0
    %570 = vmatprep.subr.mxu0 0.0
    %571 = vmatpush1.xpose.msra.mxu0 0.0
    %572 = vmatprep.subr.mxu0 0.0
    %573 = vmatpush1.xpose.msra.mxu0 0.0
    %574 = vmatprep.subr.mxu0 0.0
    %575 = vmatpush1.xpose.msra.mxu0 0.0
    %576 = vmatprep.subr.mxu0 0.0
    %577 = vmatpush1.xpose.msra.mxu0 0.0
    %578 = vmatprep.subr.mxu0 0.0
    %579 = vmatpush1.xpose.msra.mxu0 0.0
    %580 = vmatprep.subr.mxu0 0.0
    %581 = vmatpush1.xpose.msra.mxu0 0.0
    %582 = vmatprep.subr.mxu0 0.0
    %583 = vmatpush1.xpose.msra.mxu0 %v550
    %584 = vmatprep.subr.mxu0 0.0
    %585 = vmatpush2.xpose.msra.mxu0 0.0
    %586 = vmatprep.subr.mxu0 0.0
    %587 = vmatpush2.xpose.msra.mxu0 0.0
    %588 = vmatprep.subr.mxu0 0.0
    %589 = vmatpush2.xpose.msra.mxu0 0.0
    %590 = vmatprep.subr.mxu0 0.0
    %591 = vmatpush2.xpose.msra.mxu0 0.0
    %592 = vmatprep.subr.mxu0 0.0
    %593 = vmatpush2.xpose.msra.mxu0 0.0
    %594 = vmatprep.subr.mxu0 0.0
    %595 = vmatpush2.xpose.msra.mxu0 0.0
    %596 = vmatprep.subr.mxu0 0.0
    %597 = vmatpush2.xpose.msra.mxu0 0.0
    %598 = vmatprep.subr.mxu0 0.0
    %599 = vmatpush2.xpose.msra.mxu0 0.0
    %600 = vmatprep.subr.mxu0 0.0
    %601 = vmatpush2.xpose.msra.mxu0 0.0
    %602 = vmatprep.subr.mxu0 0.0
    %603 = vmatpush2.xpose.msra.mxu0 0.0
    %604 = vmatprep.subr.mxu0 0.0
    %605 = vmatpush2.xpose.msra.mxu0 0.0
    %606 = vmatprep.subr.mxu0 0.0
    %607 = vmatpush2.xpose.msra.mxu0 0.0
    %608 = vmatprep.subr.mxu0 0.0
    %609 = vmatpush2.xpose.msra.mxu0 0.0
    %610 = vmatprep.subr.mxu0 0.0
    %611 = vmatpush2.xpose.msra.mxu0 0.0
    %612 = vmatprep.subr.mxu0 0.0
    %613 = vmatpush2.xpose.msra.mxu0 0.0
    %614 = vmatprep.subr.mxu0 0.0
    %615 = vmatpush2.xpose.msra.mxu0 0.0
    %616 = vmatprep.mubr.f32.mxu0 0.0
    %617 = vmatmul.mubr.f32.gmra.mxu0 %v547
    %v618 = vpop.f32.mrf.mxu0
    %v619 = vadd.f32 0.0, %v618
    %v620 = vpop.f32.mrf.mxu0
    %621 = vdwg.mxu0
    %v622 = vsel %vm171, %v168, 0
    %v625 = vsel %vm171, %v119, 0
    %627 = vmatprep.subr.mxu0 0.0
    %628 = vmatpush1.xpose.msra.mxu0 0.0
    %629 = vmatprep.subr.mxu0 0.0
    %630 = vmatpush1.xpose.msra.mxu0 0.0
    %631 = vmatprep.subr.mxu0 0.0
    %632 = vmatpush1.xpose.msra.mxu0 0.0
    %633 = vmatprep.subr.mxu0 0.0
    %634 = vmatpush1.xpose.msra.mxu0 0.0
    %635 = vmatprep.subr.mxu0 0.0
    %636 = vmatpush1.xpose.msra.mxu0 0.0
    %637 = vmatprep.subr.mxu0 0.0
    %638 = vmatpush1.xpose.msra.mxu0 0.0
    %639 = vmatprep.subr.mxu0 0.0
    %640 = vmatpush1.xpose.msra.mxu0 0.0
    %641 = vmatprep.subr.mxu0 0.0
    %642 = vmatpush1.xpose.msra.mxu0 0.0
    %643 = vmatprep.subr.mxu0 0.0
    %644 = vmatpush1.xpose.msra.mxu0 0.0
    %645 = vmatprep.subr.mxu0 0.0
    %646 = vmatpush1.xpose.msra.mxu0 0.0
    %647 = vmatprep.subr.mxu0 0.0
    %648 = vmatpush1.xpose.msra.mxu0 0.0
    %649 = vmatprep.subr.mxu0 0.0
    %650 = vmatpush1.xpose.msra.mxu0 0.0
    %651 = vmatprep.subr.mxu0 0.0
    %652 = vmatpush1.xpose.msra.mxu0 0.0
    %653 = vmatprep.subr.mxu0 0.0
    %654 = vmatpush1.xpose.msra.mxu0 0.0
    %655 = vmatprep.subr.mxu0 0.0
    %656 = vmatpush1.xpose.msra.mxu0 0.0
    %657 = vmatprep.subr.mxu0 0.0
    %658 = vmatpush1.xpose.msra.mxu0 %v625
    %659 = vmatprep.subr.mxu0 0.0
    %660 = vmatpush2.xpose.msra.mxu0 0.0
    %661 = vmatprep.subr.mxu0 0.0
    %662 = vmatpush2.xpose.msra.mxu0 0.0
    %663 = vmatprep.subr.mxu0 0.0
    %664 = vmatpush2.xpose.msra.mxu0 0.0
    %665 = vmatprep.subr.mxu0 0.0
    %666 = vmatpush2.xpose.msra.mxu0 0.0
    %667 = vmatprep.subr.mxu0 0.0
    %668 = vmatpush2.xpose.msra.mxu0 0.0
    %669 = vmatprep.subr.mxu0 0.0
    %670 = vmatpush2.xpose.msra.mxu0 0.0
    %671 = vmatprep.subr.mxu0 0.0
    %672 = vmatpush2.xpose.msra.mxu0 0.0
    %673 = vmatprep.subr.mxu0 0.0
    %674 = vmatpush2.xpose.msra.mxu0 0.0
    %675 = vmatprep.subr.mxu0 0.0
    %676 = vmatpush2.xpose.msra.mxu0 0.0
    %677 = vmatprep.subr.mxu0 0.0
    %678 = vmatpush2.xpose.msra.mxu0 0.0
    %679 = vmatprep.subr.mxu0 0.0
    %680 = vmatpush2.xpose.msra.mxu0 0.0
    %681 = vmatprep.subr.mxu0 0.0
    %682 = vmatpush2.xpose.msra.mxu0 0.0
    %683 = vmatprep.subr.mxu0 0.0
    %684 = vmatpush2.xpose.msra.mxu0 0.0
    %685 = vmatprep.subr.mxu0 0.0
    %686 = vmatpush2.xpose.msra.mxu0 0.0
    %687 = vmatprep.subr.mxu0 0.0
    %688 = vmatpush2.xpose.msra.mxu0 0.0
    %689 = vmatprep.subr.mxu0 0.0
    %690 = vmatpush2.xpose.msra.mxu0 0.0
    %691 = vmatprep.mubr.f32.mxu0 0.0
    %692 = vmatmul.mubr.f32.gmra.mxu0 %v622
    %v693 = vpop.f32.mrf.mxu0
    %v694 = vadd.f32 0.0, %v693
    %v695 = vpop.f32.mrf.mxu0
    %696 = vdwg.mxu0
    %v697 = vsel %vm171, %v170, 0
    %v700 = vsel %vm171, %v120, 0
    %702 = vmatprep.subr.mxu0 0.0
    %703 = vmatpush1.xpose.msra.mxu0 0.0
    %704 = vmatprep.subr.mxu0 0.0
    %705 = vmatpush1.xpose.msra.mxu0 0.0
    %706 = vmatprep.subr.mxu0 0.0
    %707 = vmatpush1.xpose.msra.mxu0 0.0
    %708 = vmatprep.subr.mxu0 0.0
    %709 = vmatpush1.xpose.msra.mxu0 0.0
    %710 = vmatprep.subr.mxu0 0.0
    %711 = vmatpush1.xpose.msra.mxu0 0.0
    %712 = vmatprep.subr.mxu0 0.0
    %713 = vmatpush1.xpose.msra.mxu0 0.0
    %714 = vmatprep.subr.mxu0 0.0
    %715 = vmatpush1.xpose.msra.mxu0 0.0
    %716 = vmatprep.subr.mxu0 0.0
    %717 = vmatpush1.xpose.msra.mxu0 0.0
    %718 = vmatprep.subr.mxu0 0.0
    %719 = vmatpush1.xpose.msra.mxu0 0.0
    %720 = vmatprep.subr.mxu0 0.0
    %721 = vmatpush1.xpose.msra.mxu0 0.0
    %722 = vmatprep.subr.mxu0 0.0
    %723 = vmatpush1.xpose.msra.mxu0 0.0
    %724 = vmatprep.subr.mxu0 0.0
    %725 = vmatpush1.xpose.msra.mxu0 0.0
    %726 = vmatprep.subr.mxu0 0.0
    %727 = vmatpush1.xpose.msra.mxu0 0.0
    %728 = vmatprep.subr.mxu0 0.0
    %729 = vmatpush1.xpose.msra.mxu0 0.0
    %730 = vmatprep.subr.mxu0 0.0
    %731 = vmatpush1.xpose.msra.mxu0 0.0
    %732 = vmatprep.subr.mxu0 0.0
    %733 = vmatpush1.xpose.msra.mxu0 %v700
    %734 = vmatprep.subr.mxu0 0.0
    %735 = vmatpush2.xpose.msra.mxu0 0.0
    %736 = vmatprep.subr.mxu0 0.0
    %737 = vmatpush2.xpose.msra.mxu0 0.0
    %738 = vmatprep.subr.mxu0 0.0
    %739 = vmatpush2.xpose.msra.mxu0 0.0
    %740 = vmatprep.subr.mxu0 0.0
    %741 = vmatpush2.xpose.msra.mxu0 0.0
    %742 = vmatprep.subr.mxu0 0.0
    %743 = vmatpush2.xpose.msra.mxu0 0.0
    %744 = vmatprep.subr.mxu0 0.0
    %745 = vmatpush2.xpose.msra.mxu0 0.0
    %746 = vmatprep.subr.mxu0 0.0
    %747 = vmatpush2.xpose.msra.mxu0 0.0
    %748 = vmatprep.subr.mxu0 0.0
    %749 = vmatpush2.xpose.msra.mxu0 0.0
    %750 = vmatprep.subr.mxu0 0.0
    %751 = vmatpush2.xpose.msra.mxu0 0.0
    %752 = vmatprep.subr.mxu0 0.0
    %753 = vmatpush2.xpose.msra.mxu0 0.0
    %754 = vmatprep.subr.mxu0 0.0
    %755 = vmatpush2.xpose.msra.mxu0 0.0
    %756 = vmatprep.subr.mxu0 0.0
    %757 = vmatpush2.xpose.msra.mxu0 0.0
    %758 = vmatprep.subr.mxu0 0.0
    %759 = vmatpush2.xpose.msra.mxu0 0.0
    %760 = vmatprep.subr.mxu0 0.0
    %761 = vmatpush2.xpose.msra.mxu0 0.0
    %762 = vmatprep.subr.mxu0 0.0
    %763 = vmatpush2.xpose.msra.mxu0 0.0
    %764 = vmatprep.subr.mxu0 0.0
    %765 = vmatpush2.xpose.msra.mxu0 0.0
    %766 = vmatprep.mubr.f32.mxu0 0.0
    %767 = vmatmul.mubr.f32.gmra.mxu0 %v697
    %v768 = vpop.f32.mrf.mxu0
    %v769 = vadd.f32 0.0, %v768
    %v770 = vpop.f32.mrf.mxu0
    %771 = vdwg.mxu0
    %vm772 = vcmask 57344
    %v773 = vsel %vm772, %v244, -inf
    %774 = vmax.xlane.f32.xlu0 %v773
    %v775 = vpop.xlane.xlu0 %774
    %v776 = vsel %vm772, %v319, -inf
    %777 = vmax.xlane.f32.xlu0 %v776
    %v778 = vpop.xlane.xlu0 %777
    %v779 = vsel %vm772, %v394, -inf
    %780 = vmax.xlane.f32.xlu0 %v779
    %v781 = vpop.xlane.xlu0 %780
    %v782 = vsel %vm772, %v469, -inf
    %783 = vmax.xlane.f32.xlu0 %v782
    %v784 = vpop.xlane.xlu0 %783
    %v785 = vsel %vm772, %v544, -inf
    %786 = vmax.xlane.f32.xlu0 %v785
    %v787 = vpop.xlane.xlu0 %786
    %v788 = vsel %vm772, %v619, -inf
    %789 = vmax.xlane.f32.xlu0 %v788
    %v790 = vpop.xlane.xlu0 %789
    %v791 = vsel %vm772, %v694, -inf
    %792 = vmax.xlane.f32.xlu0 %v791
    %v793 = vpop.xlane.xlu0 %792
    %v794 = vsel %vm772, %v769, -inf
    %795 = vmax.xlane.f32.xlu0 %v794
    %v796 = vpop.xlane.xlu0 %795
    %v797 = vsub.f32 %v244, %v775
    %v798 = vsub.f32 %v319, %v778
    %v799 = vsub.f32 %v394, %v781
    %v800 = vsub.f32 %v469, %v784
    %v801 = vsub.f32 %v544, %v787
    %v802 = vsub.f32 %v619, %v790
    %v803 = vsub.f32 %v694, %v793
    %v804 = vsub.f32 %v769, %v796
    %v805 = vmul.f32 %v797, 1.442695
    %v806 = vpow.pop %v805
    %v807 = vmul.f32 %v798, 1.442695
    %v808 = vpow.pop %v807
    %v809 = vmul.f32 %v799, 1.442695
    %v810 = vpow.pop %v809
    %v811 = vmul.f32 %v800, 1.442695
    %v812 = vpow.pop %v811
    %v813 = vmul.f32 %v801, 1.442695
    %v814 = vpow.pop %v813
    %v815 = vmul.f32 %v802, 1.442695
    %v816 = vpow.pop %v815
    %v817 = vmul.f32 %v803, 1.442695
    %v818 = vpow.pop %v817
    %v819 = vmul.f32 %v804, 1.442695
    %v820 = vpow.pop %v819
    %v821 = vsel %vm772, %v806, 0.0
    %822 = vadd.xlane.f32.xlu0 %v821
    %v823 = vpop.xlane.xlu0 %822
    %v824 = vsel %vm772, %v808, 0.0
    %825 = vadd.xlane.f32.xlu0 %v824
    %v826 = vpop.xlane.xlu0 %825
    %v827 = vsel %vm772, %v810, 0.0
    %828 = vadd.xlane.f32.xlu0 %v827
    %v829 = vpop.xlane.xlu0 %828
    %v830 = vsel %vm772, %v812, 0.0
    %831 = vadd.xlane.f32.xlu0 %v830
    %v832 = vpop.xlane.xlu0 %831
    %v833 = vsel %vm772, %v814, 0.0
    %834 = vadd.xlane.f32.xlu0 %v833
    %v835 = vpop.xlane.xlu0 %834
    %v836 = vsel %vm772, %v816, 0.0
    %837 = vadd.xlane.f32.xlu0 %v836
    %v838 = vpop.xlane.xlu0 %837
    %v839 = vsel %vm772, %v818, 0.0
    %840 = vadd.xlane.f32.xlu0 %v839
    %v841 = vpop.xlane.xlu0 %840
    %v842 = vsel %vm772, %v820, 0.0
    %843 = vadd.xlane.f32.xlu0 %v842
    %v844 = vpop.xlane.xlu0 %843
    %v845 = vrcp.pop %v823
    %v846 = vrcp.pop %v826
    %v847 = vrcp.pop %v829
    %v848 = vrcp.pop %v832
    %v849 = vrcp.pop %v835
    %v850 = vrcp.pop %v838
    %v851 = vrcp.pop %v841
    %v852 = vrcp.pop %v844
    %v853 = vmul.f32 %v806, %v845
    %v854 = vmul.f32 %v808, %v846
    %v855 = vmul.f32 %v810, %v847
    %v856 = vmul.f32 %v812, %v848
    %v857 = vmul.f32 %v814, %v849
    %v858 = vmul.f32 %v816, %v850
    %v859 = vmul.f32 %v818, %v851
    %v860 = vmul.f32 %v820, %v852
    %vm861 = vcmask 1040384
    %v862 = vsel %vm861, %v853, 0.125
    %v863 = vsel %vm861, %v854, 0.125
    %v864 = vsel %vm861, %v855, 0.125
    %v865 = vsel %vm861, %v856, 0.125
    %v866 = vsel %vm861, %v857, 0.125
    %v867 = vsel %vm861, %v858, 0.125
    %v868 = vsel %vm861, %v859, 0.125
    %v869 = vsel %vm861, %v860, 0.125
    %vm870 = vcmask 64512
    %v872 = vsel %vm870, %v862, 0
    %874 = vmatprep.subr.mxu0 0.0
    %875 = vmatpush1.msra.mxu0 0.0
    %876 = vmatprep.subr.mxu0 0.0
    %877 = vmatpush1.msra.mxu0 0.0
    %878 = vmatprep.subr.mxu0 0.0
    %879 = vmatpush1.msra.mxu0 0.0
    %880 = vmatprep.subr.mxu0 0.0
    %881 = vmatpush1.msra.mxu0 0.0
    %882 = vmatprep.subr.mxu0 0.0
    %883 = vmatpush1.msra.mxu0 0.0
    %884 = vmatprep.subr.mxu0 0.0
    %885 = vmatpush1.msra.mxu0 0.0
    %886 = vmatprep.subr.mxu0 0.0
    %887 = vmatpush1.msra.mxu0 0.0
    %888 = vmatprep.subr.mxu0 0.0
    %889 = vmatpush1.msra.mxu0 0.0
    %890 = vmatprep.subr.mxu0 0.0
    %891 = vmatpush1.msra.mxu0 0.0
    %892 = vmatprep.subr.mxu0 0.0
    %893 = vmatpush1.msra.mxu0 0.0
    %894 = vmatprep.subr.mxu0 0.0
    %895 = vmatpush1.msra.mxu0 0.0
    %896 = vmatprep.subr.mxu0 0.0
    %897 = vmatpush1.msra.mxu0 0.0
    %898 = vmatprep.subr.mxu0 0.0
    %899 = vmatpush1.msra.mxu0 0.0
    %900 = vmatprep.subr.mxu0 0.0
    %901 = vmatpush1.msra.mxu0 0.0
    %902 = vmatprep.subr.mxu0 0.0
    %903 = vmatpush1.msra.mxu0 0.0
    %904 = vmatprep.subr.mxu0 0.0
    %905 = vmatpush1.msra.mxu0 %v113
    %906 = vmatprep.subr.mxu0 0.0
    %907 = vmatpush2.msra.mxu0 0.0
    %908 = vmatprep.subr.mxu0 0.0
    %909 = vmatpush2.msra.mxu0 0.0
    %910 = vmatprep.subr.mxu0 0.0
    %911 = vmatpush2.msra.mxu0 0.0
    %912 = vmatprep.subr.mxu0 0.0
    %913 = vmatpush2.msra.mxu0 0.0
    %914 = vmatprep.subr.mxu0 0.0
    %915 = vmatpush2.msra.mxu0 0.0
    %916 = vmatprep.subr.mxu0 0.0
    %917 = vmatpush2.msra.mxu0 0.0
    %918 = vmatprep.subr.mxu0 0.0
    %919 = vmatpush2.msra.mxu0 0.0
    %920 = vmatprep.subr.mxu0 0.0
    %921 = vmatpush2.msra.mxu0 0.0
    %922 = vmatprep.subr.mxu0 0.0
    %923 = vmatpush2.msra.mxu0 0.0
    %924 = vmatprep.subr.mxu0 0.0
    %925 = vmatpush2.msra.mxu0 0.0
    %926 = vmatprep.subr.mxu0 0.0
    %927 = vmatpush2.msra.mxu0 0.0
    %928 = vmatprep.subr.mxu0 0.0
    %929 = vmatpush2.msra.mxu0 0.0
    %930 = vmatprep.subr.mxu0 0.0
    %931 = vmatpush2.msra.mxu0 0.0
    %932 = vmatprep.subr.mxu0 0.0
    %933 = vmatpush2.msra.mxu0 0.0
    %934 = vmatprep.subr.mxu0 0.0
    %935 = vmatpush2.msra.mxu0 0.0
    %936 = vmatprep.subr.mxu0 0.0
    %937 = vmatpush2.msra.mxu0 0.0
    %938 = vmatprep.mubr.f32.mxu0 0.0
    %939 = vmatmul.mubr.f32.gmra.mxu0 %v872
    %v940 = vpop.f32.mrf.mxu0
    %v941 = vadd.f32 0.0, %v940
    %v942 = vpop.f32.mrf.mxu0
    %943 = vdwg.mxu0
    %v945 = vsel %vm870, %v863, 0
    %947 = vmatprep.subr.mxu0 0.0
    %948 = vmatpush1.msra.mxu0 0.0
    %949 = vmatprep.subr.mxu0 0.0
    %950 = vmatpush1.msra.mxu0 0.0
    %951 = vmatprep.subr.mxu0 0.0
    %952 = vmatpush1.msra.mxu0 0.0
    %953 = vmatprep.subr.mxu0 0.0
    %954 = vmatpush1.msra.mxu0 0.0
    %955 = vmatprep.subr.mxu0 0.0
    %956 = vmatpush1.msra.mxu0 0.0
    %957 = vmatprep.subr.mxu0 0.0
    %958 = vmatpush1.msra.mxu0 0.0
    %959 = vmatprep.subr.mxu0 0.0
    %960 = vmatpush1.msra.mxu0 0.0
    %961 = vmatprep.subr.mxu0 0.0
    %962 = vmatpush1.msra.mxu0 0.0
    %963 = vmatprep.subr.mxu0 0.0
    %964 = vmatpush1.msra.mxu0 0.0
    %965 = vmatprep.subr.mxu0 0.0
    %966 = vmatpush1.msra.mxu0 0.0
    %967 = vmatprep.subr.mxu0 0.0
    %968 = vmatpush1.msra.mxu0 0.0
    %969 = vmatprep.subr.mxu0 0.0
    %970 = vmatpush1.msra.mxu0 0.0
    %971 = vmatprep.subr.mxu0 0.0
    %972 = vmatpush1.msra.mxu0 0.0
    %973 = vmatprep.subr.mxu0 0.0
    %974 = vmatpush1.msra.mxu0 0.0
    %975 = vmatprep.subr.mxu0 0.0
    %976 = vmatpush1.msra.mxu0 0.0
    %977 = vmatprep.subr.mxu0 0.0
    %978 = vmatpush1.msra.mxu0 %v114
    %979 = vmatprep.subr.mxu0 0.0
    %980 = vmatpush2.msra.mxu0 0.0
    %981 = vmatprep.subr.mxu0 0.0
    %982 = vmatpush2.msra.mxu0 0.0
    %983 = vmatprep.subr.mxu0 0.0
    %984 = vmatpush2.msra.mxu0 0.0
    %985 = vmatprep.subr.mxu0 0.0
    %986 = vmatpush2.msra.mxu0 0.0
    %987 = vmatprep.subr.mxu0 0.0
    %988 = vmatpush2.msra.mxu0 0.0
    %989 = vmatprep.subr.mxu0 0.0
    %990 = vmatpush2.msra.mxu0 0.0
    %991 = vmatprep.subr.mxu0 0.0
    %992 = vmatpush2.msra.mxu0 0.0
    %993 = vmatprep.subr.mxu0 0.0
    %994 = vmatpush2.msra.mxu0 0.0
    %995 = vmatprep.subr.mxu0 0.0
    %996 = vmatpush2.msra.mxu0 0.0
    %997 = vmatprep.subr.mxu0 0.0
    %998 = vmatpush2.msra.mxu0 0.0
    %999 = vmatprep.subr.mxu0 0.0
    %1000 = vmatpush2.msra.mxu0 0.0
    %1001 = vmatprep.subr.mxu0 0.0
    %1002 = vmatpush2.msra.mxu0 0.0
    %1003 = vmatprep.subr.mxu0 0.0
    %1004 = vmatpush2.msra.mxu0 0.0
    %1005 = vmatprep.subr.mxu0 0.0
    %1006 = vmatpush2.msra.mxu0 0.0
    %1007 = vmatprep.subr.mxu0 0.0
    %1008 = vmatpush2.msra.mxu0 0.0
    %1009 = vmatprep.subr.mxu0 0.0
    %1010 = vmatpush2.msra.mxu0 0.0
    %1011 = vmatprep.mubr.f32.mxu0 0.0
    %1012 = vmatmul.mubr.f32.gmra.mxu0 %v945
    %v1013 = vpop.f32.mrf.mxu0
    %v1014 = vadd.f32 0.0, %v1013
    %v1015 = vpop.f32.mrf.mxu0
    %1016 = vdwg.mxu0
    %v1018 = vsel %vm870, %v864, 0
    %1020 = vmatprep.subr.mxu0 0.0
    %1021 = vmatpush1.msra.mxu0 0.0
    %1022 = vmatprep.subr.mxu0 0.0
    %1023 = vmatpush1.msra.mxu0 0.0
    %1024 = vmatprep.subr.mxu0 0.0
    %1025 = vmatpush1.msra.mxu0 0.0
    %1026 = vmatprep.subr.mxu0 0.0
    %1027 = vmatpush1.msra.mxu0 0.0
    %1028 = vmatprep.subr.mxu0 0.0
    %1029 = vmatpush1.msra.mxu0 0.0
    %1030 = vmatprep.subr.mxu0 0.0
    %1031 = vmatpush1.msra.mxu0 0.0
    %1032 = vmatprep.subr.mxu0 0.0
    %1033 = vmatpush1.msra.mxu0 0.0
    %1034 = vmatprep.subr.mxu0 0.0
    %1035 = vmatpush1.msra.mxu0 0.0
    %1036 = vmatprep.subr.mxu0 0.0
    %1037 = vmatpush1.msra.mxu0 0.0
    %1038 = vmatprep.subr.mxu0 0.0
    %1039 = vmatpush1.msra.mxu0 0.0
    %1040 = vmatprep.subr.mxu0 0.0
    %1041 = vmatpush1.msra.mxu0 0.0
    %1042 = vmatprep.subr.mxu0 0.0
    %1043 = vmatpush1.msra.mxu0 0.0
    %1044 = vmatprep.subr.mxu0 0.0
    %1045 = vmatpush1.msra.mxu0 0.0
    %1046 = vmatprep.subr.mxu0 0.0
    %1047 = vmatpush1.msra.mxu0 0.0
    %1048 = vmatprep.subr.mxu0 0.0
    %1049 = vmatpush1.msra.mxu0 0.0
    %1050 = vmatprep.subr.mxu0 0.0
    %1051 = vmatpush1.msra.mxu0 %v115
    %1052 = vmatprep.subr.mxu0 0.0
    %1053 = vmatpush2.msra.mxu0 0.0
    %1054 = vmatprep.subr.mxu0 0.0
    %1055 = vmatpush2.msra.mxu0 0.0
    %1056 = vmatprep.subr.mxu0 0.0
    %1057 = vmatpush2.msra.mxu0 0.0
    %1058 = vmatprep.subr.mxu0 0.0
    %1059 = vmatpush2.msra.mxu0 0.0
    %1060 = vmatprep.subr.mxu0 0.0
    %1061 = vmatpush2.msra.mxu0 0.0
    %1062 = vmatprep.subr.mxu0 0.0
    %1063 = vmatpush2.msra.mxu0 0.0
    %1064 = vmatprep.subr.mxu0 0.0
    %1065 = vmatpush2.msra.mxu0 0.0
    %1066 = vmatprep.subr.mxu0 0.0
    %1067 = vmatpush2.msra.mxu0 0.0
    %1068 = vmatprep.subr.mxu0 0.0
    %1069 = vmatpush2.msra.mxu0 0.0
    %1070 = vmatprep.subr.mxu0 0.0
    %1071 = vmatpush2.msra.mxu0 0.0
    %1072 = vmatprep.subr.mxu0 0.0
    %1073 = vmatpush2.msra.mxu0 0.0
    %1074 = vmatprep.subr.mxu0 0.0
    %1075 = vmatpush2.msra.mxu0 0.0
    %1076 = vmatprep.subr.mxu0 0.0
    %1077 = vmatpush2.msra.mxu0 0.0
    %1078 = vmatprep.subr.mxu0 0.0
    %1079 = vmatpush2.msra.mxu0 0.0
    %1080 = vmatprep.subr.mxu0 0.0
    %1081 = vmatpush2.msra.mxu0 0.0
    %1082 = vmatprep.subr.mxu0 0.0
    %1083 = vmatpush2.msra.mxu0 0.0
    %1084 = vmatprep.mubr.f32.mxu0 0.0
    %1085 = vmatmul.mubr.f32.gmra.mxu0 %v1018
    %v1086 = vpop.f32.mrf.mxu0
    %v1087 = vadd.f32 0.0, %v1086
    %v1088 = vpop.f32.mrf.mxu0
    %1089 = vdwg.mxu0
    %v1091 = vsel %vm870, %v865, 0
    %1093 = vmatprep.subr.mxu0 0.0
    %1094 = vmatpush1.msra.mxu0 0.0
    %1095 = vmatprep.subr.mxu0 0.0
    %1096 = vmatpush1.msra.mxu0 0.0
    %1097 = vmatprep.subr.mxu0 0.0
    %1098 = vmatpush1.msra.mxu0 0.0
    %1099 = vmatprep.subr.mxu0 0.0
    %1100 = vmatpush1.msra.mxu0 0.0
    %1101 = vmatprep.subr.mxu0 0.0
    %1102 = vmatpush1.msra.mxu0 0.0
    %1103 = vmatprep.subr.mxu0 0.0
    %1104 = vmatpush1.msra.mxu0 0.0
    %1105 = vmatprep.subr.mxu0 0.0
    %1106 = vmatpush1.msra.mxu0 0.0
    %1107 = vmatprep.subr.mxu0 0.0
    %1108 = vmatpush1.msra.mxu0 0.0
    %1109 = vmatprep.subr.mxu0 0.0
    %1110 = vmatpush1.msra.mxu0 0.0
    %1111 = vmatprep.subr.mxu0 0.0
    %1112 = vmatpush1.msra.mxu0 0.0
    %1113 = vmatprep.subr.mxu0 0.0
    %1114 = vmatpush1.msra.mxu0 0.0
    %1115 = vmatprep.subr.mxu0 0.0
    %1116 = vmatpush1.msra.mxu0 0.0
    %1117 = vmatprep.subr.mxu0 0.0
    %1118 = vmatpush1.msra.mxu0 0.0
    %1119 = vmatprep.subr.mxu0 0.0
    %1120 = vmatpush1.msra.mxu0 0.0
    %1121 = vmatprep.subr.mxu0 0.0
    %1122 = vmatpush1.msra.mxu0 0.0
    %1123 = vmatprep.subr.mxu0 0.0
    %1124 = vmatpush1.msra.mxu0 %v116
    %1125 = vmatprep.subr.mxu0 0.0
    %1126 = vmatpush2.msra.mxu0 0.0
    %1127 = vmatprep.subr.mxu0 0.0
    %1128 = vmatpush2.msra.mxu0 0.0
    %1129 = vmatprep.subr.mxu0 0.0
    %1130 = vmatpush2.msra.mxu0 0.0
    %1131 = vmatprep.subr.mxu0 0.0
    %1132 = vmatpush2.msra.mxu0 0.0
    %1133 = vmatprep.subr.mxu0 0.0
    %1134 = vmatpush2.msra.mxu0 0.0
    %1135 = vmatprep.subr.mxu0 0.0
    %1136 = vmatpush2.msra.mxu0 0.0
    %1137 = vmatprep.subr.mxu0 0.0
    %1138 = vmatpush2.msra.mxu0 0.0
    %1139 = vmatprep.subr.mxu0 0.0
    %1140 = vmatpush2.msra.mxu0 0.0
    %1141 = vmatprep.subr.mxu0 0.0
    %1142 = vmatpush2.msra.mxu0 0.0
    %1143 = vmatprep.subr.mxu0 0.0
    %1144 = vmatpush2.msra.mxu0 0.0
    %1145 = vmatprep.subr.mxu0 0.0
    %1146 = vmatpush2.msra.mxu0 0.0
    %1147 = vmatprep.subr.mxu0 0.0
    %1148 = vmatpush2.msra.mxu0 0.0
    %1149 = vmatprep.subr.mxu0 0.0
    %1150 = vmatpush2.msra.mxu0 0.0
    %1151 = vmatprep.subr.mxu0 0.0
    %1152 = vmatpush2.msra.mxu0 0.0
    %1153 = vmatprep.subr.mxu0 0.0
    %1154 = vmatpush2.msra.mxu0 0.0
    %1155 = vmatprep.subr.mxu0 0.0
    %1156 = vmatpush2.msra.mxu0 0.0
    %1157 = vmatprep.mubr.f32.mxu0 0.0
    %1158 = vmatmul.mubr.f32.gmra.mxu0 %v1091
    %v1159 = vpop.f32.mrf.mxu0
    %v1160 = vadd.f32 0.0, %v1159
    %v1161 = vpop.f32.mrf.mxu0
    %1162 = vdwg.mxu0
    %v1164 = vsel %vm870, %v866, 0
    %1166 = vmatprep.subr.mxu0 0.0
    %1167 = vmatpush1.msra.mxu0 0.0
    %1168 = vmatprep.subr.mxu0 0.0
    %1169 = vmatpush1.msra.mxu0 0.0
    %1170 = vmatprep.subr.mxu0 0.0
    %1171 = vmatpush1.msra.mxu0 0.0
    %1172 = vmatprep.subr.mxu0 0.0
    %1173 = vmatpush1.msra.mxu0 0.0
    %1174 = vmatprep.subr.mxu0 0.0
    %1175 = vmatpush1.msra.mxu0 0.0
    %1176 = vmatprep.subr.mxu0 0.0
    %1177 = vmatpush1.msra.mxu0 0.0
    %1178 = vmatprep.subr.mxu0 0.0
    %1179 = vmatpush1.msra.mxu0 0.0
    %1180 = vmatprep.subr.mxu0 0.0
    %1181 = vmatpush1.msra.mxu0 0.0
    %1182 = vmatprep.subr.mxu0 0.0
    %1183 = vmatpush1.msra.mxu0 0.0
    %1184 = vmatprep.subr.mxu0 0.0
    %1185 = vmatpush1.msra.mxu0 0.0
    %1186 = vmatprep.subr.mxu0 0.0
    %1187 = vmatpush1.msra.mxu0 0.0
    %1188 = vmatprep.subr.mxu0 0.0
    %1189 = vmatpush1.msra.mxu0 0.0
    %1190 = vmatprep.subr.mxu0 0.0
    %1191 = vmatpush1.msra.mxu0 0.0
    %1192 = vmatprep.subr.mxu0 0.0
    %1193 = vmatpush1.msra.mxu0 0.0
    %1194 = vmatprep.subr.mxu0 0.0
    %1195 = vmatpush1.msra.mxu0 0.0
    %1196 = vmatprep.subr.mxu0 0.0
    %1197 = vmatpush1.msra.mxu0 %v117
    %1198 = vmatprep.subr.mxu0 0.0
    %1199 = vmatpush2.msra.mxu0 0.0
    %1200 = vmatprep.subr.mxu0 0.0
    %1201 = vmatpush2.msra.mxu0 0.0
    %1202 = vmatprep.subr.mxu0 0.0
    %1203 = vmatpush2.msra.mxu0 0.0
    %1204 = vmatprep.subr.mxu0 0.0
    %1205 = vmatpush2.msra.mxu0 0.0
    %1206 = vmatprep.subr.mxu0 0.0
    %1207 = vmatpush2.msra.mxu0 0.0
    %1208 = vmatprep.subr.mxu0 0.0
    %1209 = vmatpush2.msra.mxu0 0.0
    %1210 = vmatprep.subr.mxu0 0.0
    %1211 = vmatpush2.msra.mxu0 0.0
    %1212 = vmatprep.subr.mxu0 0.0
    %1213 = vmatpush2.msra.mxu0 0.0
    %1214 = vmatprep.subr.mxu0 0.0
    %1215 = vmatpush2.msra.mxu0 0.0
    %1216 = vmatprep.subr.mxu0 0.0
    %1217 = vmatpush2.msra.mxu0 0.0
    %1218 = vmatprep.subr.mxu0 0.0
    %1219 = vmatpush2.msra.mxu0 0.0
    %1220 = vmatprep.subr.mxu0 0.0
    %1221 = vmatpush2.msra.mxu0 0.0
    %1222 = vmatprep.subr.mxu0 0.0
    %1223 = vmatpush2.msra.mxu0 0.0
    %1224 = vmatprep.subr.mxu0 0.0
    %1225 = vmatpush2.msra.mxu0 0.0
    %1226 = vmatprep.subr.mxu0 0.0
    %1227 = vmatpush2.msra.mxu0 0.0
    %1228 = vmatprep.subr.mxu0 0.0
    %1229 = vmatpush2.msra.mxu0 0.0
    %1230 = vmatprep.mubr.f32.mxu0 0.0
    %1231 = vmatmul.mubr.f32.gmra.mxu0 %v1164
    %v1232 = vpop.f32.mrf.mxu0
    %v1233 = vadd.f32 0.0, %v1232
    %v1234 = vpop.f32.mrf.mxu0
    %1235 = vdwg.mxu0
    %v1237 = vsel %vm870, %v867, 0
    %1239 = vmatprep.subr.mxu0 0.0
    %1240 = vmatpush1.msra.mxu0 0.0
    %1241 = vmatprep.subr.mxu0 0.0
    %1242 = vmatpush1.msra.mxu0 0.0
    %1243 = vmatprep.subr.mxu0 0.0
    %1244 = vmatpush1.msra.mxu0 0.0
    %1245 = vmatprep.subr.mxu0 0.0
    %1246 = vmatpush1.msra.mxu0 0.0
    %1247 = vmatprep.subr.mxu0 0.0
    %1248 = vmatpush1.msra.mxu0 0.0
    %1249 = vmatprep.subr.mxu0 0.0
    %1250 = vmatpush1.msra.mxu0 0.0
    %1251 = vmatprep.subr.mxu0 0.0
    %1252 = vmatpush1.msra.mxu0 0.0
    %1253 = vmatprep.subr.mxu0 0.0
    %1254 = vmatpush1.msra.mxu0 0.0
    %1255 = vmatprep.subr.mxu0 0.0
    %1256 = vmatpush1.msra.mxu0 0.0
    %1257 = vmatprep.subr.mxu0 0.0
    %1258 = vmatpush1.msra.mxu0 0.0
    %1259 = vmatprep.subr.mxu0 0.0
    %1260 = vmatpush1.msra.mxu0 0.0
    %1261 = vmatprep.subr.mxu0 0.0
    %1262 = vmatpush1.msra.mxu0 0.0
    %1263 = vmatprep.subr.mxu0 0.0
    %1264 = vmatpush1.msra.mxu0 0.0
    %1265 = vmatprep.subr.mxu0 0.0
    %1266 = vmatpush1.msra.mxu0 0.0
    %1267 = vmatprep.subr.mxu0 0.0
    %1268 = vmatpush1.msra.mxu0 0.0
    %1269 = vmatprep.subr.mxu0 0.0
    %1270 = vmatpush1.msra.mxu0 %v118
    %1271 = vmatprep.subr.mxu0 0.0
    %1272 = vmatpush2.msra.mxu0 0.0
    %1273 = vmatprep.subr.mxu0 0.0
    %1274 = vmatpush2.msra.mxu0 0.0
    %1275 = vmatprep.subr.mxu0 0.0
    %1276 = vmatpush2.msra.mxu0 0.0
    %1277 = vmatprep.subr.mxu0 0.0
    %1278 = vmatpush2.msra.mxu0 0.0
    %1279 = vmatprep.subr.mxu0 0.0
    %1280 = vmatpush2.msra.mxu0 0.0
    %1281 = vmatprep.subr.mxu0 0.0
    %1282 = vmatpush2.msra.mxu0 0.0
    %1283 = vmatprep.subr.mxu0 0.0
    %1284 = vmatpush2.msra.mxu0 0.0
    %1285 = vmatprep.subr.mxu0 0.0
    %1286 = vmatpush2.msra.mxu0 0.0
    %1287 = vmatprep.subr.mxu0 0.0
    %1288 = vmatpush2.msra.mxu0 0.0
    %1289 = vmatprep.subr.mxu0 0.0
    %1290 = vmatpush2.msra.mxu0 0.0
    %1291 = vmatprep.subr.mxu0 0.0
    %1292 = vmatpush2.msra.mxu0 0.0
    %1293 = vmatprep.subr.mxu0 0.0
    %1294 = vmatpush2.msra.mxu0 0.0
    %1295 = vmatprep.subr.mxu0 0.0
    %1296 = vmatpush2.msra.mxu0 0.0
    %1297 = vmatprep.subr.mxu0 0.0
    %1298 = vmatpush2.msra.mxu0 0.0
    %1299 = vmatprep.subr.mxu0 0.0
    %1300 = vmatpush2.msra.mxu0 0.0
    %1301 = vmatprep.subr.mxu0 0.0
    %1302 = vmatpush2.msra.mxu0 0.0
    %1303 = vmatprep.mubr.f32.mxu0 0.0
    %1304 = vmatmul.mubr.f32.gmra.mxu0 %v1237
    %v1305 = vpop.f32.mrf.mxu0
    %v1306 = vadd.f32 0.0, %v1305
    %v1307 = vpop.f32.mrf.mxu0
    %1308 = vdwg.mxu0
    %v1310 = vsel %vm870, %v868, 0
    %1312 = vmatprep.subr.mxu0 0.0
    %1313 = vmatpush1.msra.mxu0 0.0
    %1314 = vmatprep.subr.mxu0 0.0
    %1315 = vmatpush1.msra.mxu0 0.0
    %1316 = vmatprep.subr.mxu0 0.0
    %1317 = vmatpush1.msra.mxu0 0.0
    %1318 = vmatprep.subr.mxu0 0.0
    %1319 = vmatpush1.msra.mxu0 0.0
    %1320 = vmatprep.subr.mxu0 0.0
    %1321 = vmatpush1.msra.mxu0 0.0
    %1322 = vmatprep.subr.mxu0 0.0
    %1323 = vmatpush1.msra.mxu0 0.0
    %1324 = vmatprep.subr.mxu0 0.0
    %1325 = vmatpush1.msra.mxu0 0.0
    %1326 = vmatprep.subr.mxu0 0.0
    %1327 = vmatpush1.msra.mxu0 0.0
    %1328 = vmatprep.subr.mxu0 0.0
    %1329 = vmatpush1.msra.mxu0 0.0
    %1330 = vmatprep.subr.mxu0 0.0
    %1331 = vmatpush1.msra.mxu0 0.0
    %1332 = vmatprep.subr.mxu0 0.0
    %1333 = vmatpush1.msra.mxu0 0.0
    %1334 = vmatprep.subr.mxu0 0.0
    %1335 = vmatpush1.msra.mxu0 0.0
    %1336 = vmatprep.subr.mxu0 0.0
    %1337 = vmatpush1.msra.mxu0 0.0
    %1338 = vmatprep.subr.mxu0 0.0
    %1339 = vmatpush1.msra.mxu0 0.0
    %1340 = vmatprep.subr.mxu0 0.0
    %1341 = vmatpush1.msra.mxu0 0.0
    %1342 = vmatprep.subr.mxu0 0.0
    %1343 = vmatpush1.msra.mxu0 %v119
    %1344 = vmatprep.subr.mxu0 0.0
    %1345 = vmatpush2.msra.mxu0 0.0
    %1346 = vmatprep.subr.mxu0 0.0
    %1347 = vmatpush2.msra.mxu0 0.0
    %1348 = vmatprep.subr.mxu0 0.0
    %1349 = vmatpush2.msra.mxu0 0.0
    %1350 = vmatprep.subr.mxu0 0.0
    %1351 = vmatpush2.msra.mxu0 0.0
    %1352 = vmatprep.subr.mxu0 0.0
    %1353 = vmatpush2.msra.mxu0 0.0
    %1354 = vmatprep.subr.mxu0 0.0
    %1355 = vmatpush2.msra.mxu0 0.0
    %1356 = vmatprep.subr.mxu0 0.0
    %1357 = vmatpush2.msra.mxu0 0.0
    %1358 = vmatprep.subr.mxu0 0.0
    %1359 = vmatpush2.msra.mxu0 0.0
    %1360 = vmatprep.subr.mxu0 0.0
    %1361 = vmatpush2.msra.mxu0 0.0
    %1362 = vmatprep.subr.mxu0 0.0
    %1363 = vmatpush2.msra.mxu0 0.0
    %1364 = vmatprep.subr.mxu0 0.0
    %1365 = vmatpush2.msra.mxu0 0.0
    %1366 = vmatprep.subr.mxu0 0.0
    %1367 = vmatpush2.msra.mxu0 0.0
    %1368 = vmatprep.subr.mxu0 0.0
    %1369 = vmatpush2.msra.mxu0 0.0
    %1370 = vmatprep.subr.mxu0 0.0
    %1371 = vmatpush2.msra.mxu0 0.0
    %1372 = vmatprep.subr.mxu0 0.0
    %1373 = vmatpush2.msra.mxu0 0.0
    %1374 = vmatprep.subr.mxu0 0.0
    %1375 = vmatpush2.msra.mxu0 0.0
    %1376 = vmatprep.mubr.f32.mxu0 0.0
    %1377 = vmatmul.mubr.f32.gmra.mxu0 %v1310
    %v1378 = vpop.f32.mrf.mxu0
    %v1379 = vadd.f32 0.0, %v1378
    %v1380 = vpop.f32.mrf.mxu0
    %1381 = vdwg.mxu0
    %v1383 = vsel %vm870, %v869, 0
    %1385 = vmatprep.subr.mxu0 0.0
    %1386 = vmatpush1.msra.mxu0 0.0
    %1387 = vmatprep.subr.mxu0 0.0
    %1388 = vmatpush1.msra.mxu0 0.0
    %1389 = vmatprep.subr.mxu0 0.0
    %1390 = vmatpush1.msra.mxu0 0.0
    %1391 = vmatprep.subr.mxu0 0.0
    %1392 = vmatpush1.msra.mxu0 0.0
    %1393 = vmatprep.subr.mxu0 0.0
    %1394 = vmatpush1.msra.mxu0 0.0
    %1395 = vmatprep.subr.mxu0 0.0
    %1396 = vmatpush1.msra.mxu0 0.0
    %1397 = vmatprep.subr.mxu0 0.0
    %1398 = vmatpush1.msra.mxu0 0.0
    %1399 = vmatprep.subr.mxu0 0.0
    %1400 = vmatpush1.msra.mxu0 0.0
    %1401 = vmatprep.subr.mxu0 0.0
    %1402 = vmatpush1.msra.mxu0 0.0
    %1403 = vmatprep.subr.mxu0 0.0
    %1404 = vmatpush1.msra.mxu0 0.0
    %1405 = vmatprep.subr.mxu0 0.0
    %1406 = vmatpush1.msra.mxu0 0.0
    %1407 = vmatprep.subr.mxu0 0.0
    %1408 = vmatpush1.msra.mxu0 0.0
    %1409 = vmatprep.subr.mxu0 0.0
    %1410 = vmatpush1.msra.mxu0 0.0
    %1411 = vmatprep.subr.mxu0 0.0
    %1412 = vmatpush1.msra.mxu0 0.0
    %1413 = vmatprep.subr.mxu0 0.0
    %1414 = vmatpush1.msra.mxu0 0.0
    %1415 = vmatprep.subr.mxu0 0.0
    %1416 = vmatpush1.msra.mxu0 %v120
    %1417 = vmatprep.subr.mxu0 0.0
    %1418 = vmatpush2.msra.mxu0 0.0
    %1419 = vmatprep.subr.mxu0 0.0
    %1420 = vmatpush2.msra.mxu0 0.0
    %1421 = vmatprep.subr.mxu0 0.0
    %1422 = vmatpush2.msra.mxu0 0.0
    %1423 = vmatprep.subr.mxu0 0.0
    %1424 = vmatpush2.msra.mxu0 0.0
    %1425 = vmatprep.subr.mxu0 0.0
    %1426 = vmatpush2.msra.mxu0 0.0
    %1427 = vmatprep.subr.mxu0 0.0
    %1428 = vmatpush2.msra.mxu0 0.0
    %1429 = vmatprep.subr.mxu0 0.0
    %1430 = vmatpush2.msra.mxu0 0.0
    %1431 = vmatprep.subr.mxu0 0.0
    %1432 = vmatpush2.msra.mxu0 0.0
    %1433 = vmatprep.subr.mxu0 0.0
    %1434 = vmatpush2.msra.mxu0 0.0
    %1435 = vmatprep.subr.mxu0 0.0
    %1436 = vmatpush2.msra.mxu0 0.0
    %1437 = vmatprep.subr.mxu0 0.0
    %1438 = vmatpush2.msra.mxu0 0.0
    %1439 = vmatprep.subr.mxu0 0.0
    %1440 = vmatpush2.msra.mxu0 0.0
    %1441 = vmatprep.subr.mxu0 0.0
    %1442 = vmatpush2.msra.mxu0 0.0
    %1443 = vmatprep.subr.mxu0 0.0
    %1444 = vmatpush2.msra.mxu0 0.0
    %1445 = vmatprep.subr.mxu0 0.0
    %1446 = vmatpush2.msra.mxu0 0.0
    %1447 = vmatprep.subr.mxu0 0.0
    %1448 = vmatpush2.msra.mxu0 0.0
    %1449 = vmatprep.mubr.f32.mxu0 0.0
    %1450 = vmatmul.mubr.f32.gmra.mxu0 %v1383
    %v1451 = vpop.f32.mrf.mxu0
    %v1452 = vadd.f32 0.0, %v1451
    %v1453 = vpop.f32.mrf.mxu0
    %1454 = vdwg.mxu0
    %v1455 = vld [vmem:[#allocation7] sm:$0xff]
    %v1456 = vld [vmem:[#allocation7 + $0x8] sm:$0xff]
    %v1457 = vld [vmem:[#allocation7 + $0x10] sm:$0xff]
    %v1458 = vld [vmem:[#allocation7 + $0x18] sm:$0xff]
    %v1459 = vld [vmem:[#allocation7 + $0x20] sm:$0xff]
    %v1460 = vld [vmem:[#allocation7 + $0x28] sm:$0xff]
    %v1461 = vld [vmem:[#allocation7 + $0x30] sm:$0xff]
    %v1462 = vld [vmem:[#allocation7 + $0x38] sm:$0xff]
    %v1463 = vld [vmem:[#allocation7 + $0x40] sm:$0xff]
    %v1464 = vld [vmem:[#allocation7 + $0x48] sm:$0xff]
    %v1465 = vld [vmem:[#allocation7 + $0x50] sm:$0xff]
    %v1466 = vld [vmem:[#allocation7 + $0x58] sm:$0xff]
    %v1467 = vld [vmem:[#allocation7 + $0x60] sm:$0xff]
    %v1468 = vld [vmem:[#allocation7 + $0x68] sm:$0xff]
    %v1469 = vld [vmem:[#allocation7 + $0x70] sm:$0xff]
    %v1470 = vld [vmem:[#allocation7 + $0x78] sm:$0xff]
    %v1471 = vld [vmem:[#allocation8] sm:$0xff]
    %v1472 = vld [vmem:[#allocation8 + $0x8] sm:$0xff]
    %v1473 = vld [vmem:[#allocation8 + $0x10] sm:$0xff]
    %v1474 = vld [vmem:[#allocation8 + $0x18] sm:$0xff]
    %v1475 = vld [vmem:[#allocation8 + $0x20] sm:$0xff]
    %v1476 = vld [vmem:[#allocation8 + $0x28] sm:$0xff]
    %v1477 = vld [vmem:[#allocation8 + $0x30] sm:$0xff]
    %v1478 = vld [vmem:[#allocation8 + $0x38] sm:$0xff]
    %v1479 = vld [vmem:[#allocation8 + $0x40] sm:$0xff]
    %v1480 = vld [vmem:[#allocation8 + $0x48] sm:$0xff]
    %v1481 = vld [vmem:[#allocation8 + $0x50] sm:$0xff]
    %v1482 = vld [vmem:[#allocation8 + $0x58] sm:$0xff]
    %v1483 = vld [vmem:[#allocation8 + $0x60] sm:$0xff]
    %v1484 = vld [vmem:[#allocation8 + $0x68] sm:$0xff]
    %v1485 = vld [vmem:[#allocation8 + $0x70] sm:$0xff]
    %v1486 = vld [vmem:[#allocation8 + $0x78] sm:$0xff]
    %v1495 = vrot.slane %v1014, 7
    %vm1496 = vcmask 1041409
    %v1497 = vsel %vm1496, %v1495, %v941
    %v1498 = vrot.slane %v1087, 6
    %vm1499 = vcmask 1042434
    %v1500 = vsel %vm1499, %v1498, %v1497
    %v1501 = vrot.slane %v1160, 5
    %vm1502 = vcmask 1043459
    %v1503 = vsel %vm1502, %v1501, %v1500
    %v1504 = vrot.slane %v1233, 4
    %vm1505 = vcmask 1044484
    %v1506 = vsel %vm1505, %v1504, %v1503
    %v1507 = vrot.slane %v1306, 3
    %vm1508 = vcmask 1045509
    %v1509 = vsel %vm1508, %v1507, %v1506
    %v1510 = vrot.slane %v1379, 2
    %vm1511 = vcmask 1046534
    %v1512 = vsel %vm1511, %v1510, %v1509
    %v1513 = vrot.slane %v1452, 1
    %vm1514 = vcmask 1047559
    %v1515 = vsel %vm1514, %v1513, %v1512
    %v1516 = vsel %vm171, %v1515, 0
    %1518 = vmatprep.subr.mxu0 0.0
    %1519 = vmatpush1.msra.mxu0 0.0
    %1520 = vmatprep.subr.mxu0 0.0
    %1521 = vmatpush1.msra.mxu0 0.0
    %1522 = vmatprep.subr.mxu0 0.0
    %1523 = vmatpush1.msra.mxu0 0.0
    %1524 = vmatprep.subr.mxu0 0.0
    %1525 = vmatpush1.msra.mxu0 0.0
    %1526 = vmatprep.subr.mxu0 0.0
    %1527 = vmatpush1.msra.mxu0 0.0
    %1528 = vmatprep.subr.mxu0 0.0
    %1529 = vmatpush1.msra.mxu0 0.0
    %1530 = vmatprep.subr.mxu0 0.0
    %1531 = vmatpush1.msra.mxu0 0.0
    %1532 = vmatprep.subr.mxu0 0.0
    %1533 = vmatpush1.msra.mxu0 0.0
    %1534 = vmatprep.subr.mxu0 %v1486
    %1535 = vmatpush1.msra.mxu0 %v1485
    %1536 = vmatprep.subr.mxu0 %v1484
    %1537 = vmatpush1.msra.mxu0 %v1483
    %1538 = vmatprep.subr.mxu0 %v1482
    %1539 = vmatpush1.msra.mxu0 %v1481
    %1540 = vmatprep.subr.mxu0 %v1480
    %1541 = vmatpush1.msra.mxu0 %v1479
    %1542 = vmatprep.subr.mxu0 %v1478
    %1543 = vmatpush1.msra.mxu0 %v1477
    %1544 = vmatprep.subr.mxu0 %v1476
    %1545 = vmatpush1.msra.mxu0 %v1475
    %1546 = vmatprep.subr.mxu0 %v1474
    %1547 = vmatpush1.msra.mxu0 %v1473
    %1548 = vmatprep.subr.mxu0 %v1472
    %1549 = vmatpush1.msra.mxu0 %v1471
    %1550 = vmatprep.subr.mxu0 0.0
    %1551 = vmatpush2.msra.mxu0 0.0
    %1552 = vmatprep.subr.mxu0 0.0
    %1553 = vmatpush2.msra.mxu0 0.0
    %1554 = vmatprep.subr.mxu0 0.0
    %1555 = vmatpush2.msra.mxu0 0.0
    %1556 = vmatprep.subr.mxu0 0.0
    %1557 = vmatpush2.msra.mxu0 0.0
    %1558 = vmatprep.subr.mxu0 0.0
    %1559 = vmatpush2.msra.mxu0 0.0
    %1560 = vmatprep.subr.mxu0 0.0
    %1561 = vmatpush2.msra.mxu0 0.0
    %1562 = vmatprep.subr.mxu0 0.0
    %1563 = vmatpush2.msra.mxu0 0.0
    %1564 = vmatprep.subr.mxu0 0.0
    %1565 = vmatpush2.msra.mxu0 0.0
    %1566 = vmatprep.subr.mxu0 0.0
    %1567 = vmatpush2.msra.mxu0 0.0
    %1568 = vmatprep.subr.mxu0 0.0
    %1569 = vmatpush2.msra.mxu0 0.0
    %1570 = vmatprep.subr.mxu0 0.0
    %1571 = vmatpush2.msra.mxu0 0.0
    %1572 = vmatprep.subr.mxu0 0.0
    %1573 = vmatpush2.msra.mxu0 0.0
    %1574 = vmatprep.subr.mxu0 0.0
    %1575 = vmatpush2.msra.mxu0 0.0
    %1576 = vmatprep.subr.mxu0 0.0
    %1577 = vmatpush2.msra.mxu0 0.0
    %1578 = vmatprep.subr.mxu0 0.0
    %1579 = vmatpush2.msra.mxu0 0.0
    %1580 = vmatprep.subr.mxu0 0.0
    %1581 = vmatpush2.msra.mxu0 0.0
    %1582 = vmatprep.mubr.f32.mxu0 0.0
    %1583 = vmatmul.mubr.f32.gmra.mxu0 %v1516
    %v1584 = vpop.f32.mrf.mxu0
    %v1585 = vadd.f32 0.0, %v1584
    %v1586 = vpop.f32.mrf.mxu0
    %v1587 = vadd.f32 0.0, %v1586
    %1588 = vdwg.mxu0
    %v1590 = vsel %vm171, %v111, 0
    %1592 = vmatprep.subr.mxu0 0.0
    %1593 = vmatpush1.msra.mxu0 0.0
    %1594 = vmatprep.subr.mxu0 0.0
    %1595 = vmatpush1.msra.mxu0 0.0
    %1596 = vmatprep.subr.mxu0 0.0
    %1597 = vmatpush1.msra.mxu0 0.0
    %1598 = vmatprep.subr.mxu0 0.0
    %1599 = vmatpush1.msra.mxu0 0.0
    %1600 = vmatprep.subr.mxu0 0.0
    %1601 = vmatpush1.msra.mxu0 0.0
    %1602 = vmatprep.subr.mxu0 0.0
    %1603 = vmatpush1.msra.mxu0 0.0
    %1604 = vmatprep.subr.mxu0 0.0
    %1605 = vmatpush1.msra.mxu0 0.0
    %1606 = vmatprep.subr.mxu0 0.0
    %1607 = vmatpush1.msra.mxu0 0.0
    %1608 = vmatprep.subr.mxu0 %v1470
    %1609 = vmatpush1.msra.mxu0 %v1469
    %1610 = vmatprep.subr.mxu0 %v1468
    %1611 = vmatpush1.msra.mxu0 %v1467
    %1612 = vmatprep.subr.mxu0 %v1466
    %1613 = vmatpush1.msra.mxu0 %v1465
    %1614 = vmatprep.subr.mxu0 %v1464
    %1615 = vmatpush1.msra.mxu0 %v1463
    %1616 = vmatprep.subr.mxu0 %v1462
    %1617 = vmatpush1.msra.mxu0 %v1461
    %1618 = vmatprep.subr.mxu0 %v1460
    %1619 = vmatpush1.msra.mxu0 %v1459
    %1620 = vmatprep.subr.mxu0 %v1458
    %1621 = vmatpush1.msra.mxu0 %v1457
    %1622 = vmatprep.subr.mxu0 %v1456
    %1623 = vmatpush1.msra.mxu0 %v1455
    %1624 = vmatprep.subr.mxu0 0.0
    %1625 = vmatpush2.msra.mxu0 0.0
    %1626 = vmatprep.subr.mxu0 0.0
    %1627 = vmatpush2.msra.mxu0 0.0
    %1628 = vmatprep.subr.mxu0 0.0
    %1629 = vmatpush2.msra.mxu0 0.0
    %1630 = vmatprep.subr.mxu0 0.0
    %1631 = vmatpush2.msra.mxu0 0.0
    %1632 = vmatprep.subr.mxu0 0.0
    %1633 = vmatpush2.msra.mxu0 0.0
    %1634 = vmatprep.subr.mxu0 0.0
    %1635 = vmatpush2.msra.mxu0 0.0
    %1636 = vmatprep.subr.mxu0 0.0
    %1637 = vmatpush2.msra.mxu0 0.0
    %1638 = vmatprep.subr.mxu0 0.0
    %1639 = vmatpush2.msra.mxu0 0.0
    %1640 = vmatprep.subr.mxu0 0.0
    %1641 = vmatpush2.msra.mxu0 0.0
    %1642 = vmatprep.subr.mxu0 0.0
    %1643 = vmatpush2.msra.mxu0 0.0
    %1644 = vmatprep.subr.mxu0 0.0
    %1645 = vmatpush2.msra.mxu0 0.0
    %1646 = vmatprep.subr.mxu0 0.0
    %1647 = vmatpush2.msra.mxu0 0.0
    %1648 = vmatprep.subr.mxu0 0.0
    %1649 = vmatpush2.msra.mxu0 0.0
    %1650 = vmatprep.subr.mxu0 0.0
    %1651 = vmatpush2.msra.mxu0 0.0
    %1652 = vmatprep.subr.mxu0 0.0
    %1653 = vmatpush2.msra.mxu0 0.0
    %1654 = vmatprep.subr.mxu0 0.0
    %1655 = vmatpush2.msra.mxu0 0.0
    %1656 = vmatprep.mubr.f32.mxu0 0.0
    %1657 = vmatmul.mubr.f32.gmra.mxu0 %v1590
    %v1658 = vpop.f32.mrf.mxu0
    %v1659 = vadd.f32 %v1585, %v1658
    %v1660 = vpop.f32.mrf.mxu0
    %v1661 = vadd.f32 %v1587, %v1660
    %1662 = vdwg.mxu0
    %v1663 = vld [vmem:[#allocation10] sm:$0xff]
    %v1664 = vld [vmem:[#allocation10 + $0x8] sm:$0xff]
    %v1665 = vld [vmem:[#allocation10 + $0x10] sm:$0xff]
    %v1666 = vld [vmem:[#allocation10 + $0x18] sm:$0xff]
    %v1667 = vld [vmem:[#allocation10 + $0x20] sm:$0xff]
    %v1668 = vld [vmem:[#allocation10 + $0x28] sm:$0xff]
    %v1669 = vld [vmem:[#allocation10 + $0x30] sm:$0xff]
    %v1670 = vld [vmem:[#allocation10 + $0x38] sm:$0xff]
    %v1671 = vld [vmem:[#allocation10 + $0x40] sm:$0xff]
    %v1672 = vld [vmem:[#allocation10 + $0x48] sm:$0xff]
    %v1673 = vld [vmem:[#allocation10 + $0x50] sm:$0xff]
    %v1674 = vld [vmem:[#allocation10 + $0x58] sm:$0xff]
    %v1675 = vld [vmem:[#allocation10 + $0x60] sm:$0xff]
    %v1676 = vld [vmem:[#allocation10 + $0x68] sm:$0xff]
    %v1677 = vld [vmem:[#allocation10 + $0x70] sm:$0xff]
    %v1678 = vld [vmem:[#allocation10 + $0x78] sm:$0xff]
    %v1679 = vrot.slane %v941, 1
    %v1680 = vsel %vm1496, %v1014, %v1679
    %v1681 = vrot.slane %v1087, 7
    %v1682 = vsel %vm1499, %v1681, %v1680
    %v1683 = vrot.slane %v1160, 6
    %v1684 = vsel %vm1502, %v1683, %v1682
    %v1685 = vrot.slane %v1233, 5
    %v1686 = vsel %vm1505, %v1685, %v1684
    %v1687 = vrot.slane %v1306, 4
    %v1688 = vsel %vm1508, %v1687, %v1686
    %v1689 = vrot.slane %v1379, 3
    %v1690 = vsel %vm1511, %v1689, %v1688
    %v1691 = vrot.slane %v1452, 2
    %v1692 = vsel %vm1514, %v1691, %v1690
    %v1693 = vsel %vm171, %v1692, 0
    %1695 = vmatprep.subr.mxu0 0.0
    %1696 = vmatpush1.msra.mxu0 0.0
    %1697 = vmatprep.subr.mxu0 0.0
    %1698 = vmatpush1.msra.mxu0 0.0
    %1699 = vmatprep.subr.mxu0 0.0
    %1700 = vmatpush1.msra.mxu0 0.0
    %1701 = vmatprep.subr.mxu0 0.0
    %1702 = vmatpush1.msra.mxu0 0.0
    %1703 = vmatprep.subr.mxu0 0.0
    %1704 = vmatpush1.msra.mxu0 0.0
    %1705 = vmatprep.subr.mxu0 0.0
    %1706 = vmatpush1.msra.mxu0 0.0
    %1707 = vmatprep.subr.mxu0 0.0
    %1708 = vmatpush1.msra.mxu0 0.0
    %1709 = vmatprep.subr.mxu0 0.0
    %1710 = vmatpush1.msra.mxu0 0.0
    %1711 = vmatprep.subr.mxu0 %v1678
    %1712 = vmatpush1.msra.mxu0 %v1677
    %1713 = vmatprep.subr.mxu0 %v1676
    %1714 = vmatpush1.msra.mxu0 %v1675
    %1715 = vmatprep.subr.mxu0 %v1674
    %1716 = vmatpush1.msra.mxu0 %v1673
    %1717 = vmatprep.subr.mxu0 %v1672
    %1718 = vmatpush1.msra.mxu0 %v1671
    %1719 = vmatprep.subr.mxu0 %v1670
    %1720 = vmatpush1.msra.mxu0 %v1669
    %1721 = vmatprep.subr.mxu0 %v1668
    %1722 = vmatpush1.msra.mxu0 %v1667
    %1723 = vmatprep.subr.mxu0 %v1666
    %1724 = vmatpush1.msra.mxu0 %v1665
    %1725 = vmatprep.subr.mxu0 %v1664
    %1726 = vmatpush1.msra.mxu0 %v1663
    %1727 = vmatprep.subr.mxu0 0.0
    %1728 = vmatpush2.msra.mxu0 0.0
    %1729 = vmatprep.subr.mxu0 0.0
    %1730 = vmatpush2.msra.mxu0 0.0
    %1731 = vmatprep.subr.mxu0 0.0
    %1732 = vmatpush2.msra.mxu0 0.0
    %1733 = vmatprep.subr.mxu0 0.0
    %1734 = vmatpush2.msra.mxu0 0.0
    %1735 = vmatprep.subr.mxu0 0.0
    %1736 = vmatpush2.msra.mxu0 0.0
    %1737 = vmatprep.subr.mxu0 0.0
    %1738 = vmatpush2.msra.mxu0 0.0
    %1739 = vmatprep.subr.mxu0 0.0
    %1740 = vmatpush2.msra.mxu0 0.0
    %1741 = vmatprep.subr.mxu0 0.0
    %1742 = vmatpush2.msra.mxu0 0.0
    %1743 = vmatprep.subr.mxu0 0.0
    %1744 = vmatpush2.msra.mxu0 0.0
    %1745 = vmatprep.subr.mxu0 0.0
    %1746 = vmatpush2.msra.mxu0 0.0
    %1747 = vmatprep.subr.mxu0 0.0
    %1748 = vmatpush2.msra.mxu0 0.0
    %1749 = vmatprep.subr.mxu0 0.0
    %1750 = vmatpush2.msra.mxu0 0.0
    %1751 = vmatprep.subr.mxu0 0.0
    %1752 = vmatpush2.msra.mxu0 0.0
    %1753 = vmatprep.subr.mxu0 0.0
    %1754 = vmatpush2.msra.mxu0 0.0
    %1755 = vmatprep.subr.mxu0 0.0
    %1756 = vmatpush2.msra.mxu0 0.0
    %1757 = vmatprep.subr.mxu0 0.0
    %1758 = vmatpush2.msra.mxu0 0.0
    %1759 = vmatprep.mubr.f32.mxu0 0.0
    %1760 = vmatmul.mubr.f32.gmra.mxu0 %v1693
    %v1761 = vpop.f32.mrf.mxu0
    %v1762 = vadd.f32 0.0, %v1761
    %v1763 = vpop.f32.mrf.mxu0
    %v1764 = vadd.f32 0.0, %v1763
    %1765 = vdwg.mxu0
    %v1766 = vadd.f32 %v1659, %v1762
    %v1767 = vadd.f32 %v1661, %v1764
    %v1768 = vld [vmem:[%s6] sm:$0x3]
    %v1770 = vlaneseq
    %v1771 = vshrl.u32 %v1770, 7
    %v1772 = vsub.s32 0, %v1771
    %v1773 = vrot.slane %v1768, %v1772
    %v1774 = vlaneseq
    %v1775 = vshrl.u32 %v1774, 7
    %v1776 = vsub.s32 1, %v1775
    %v1777 = vrot.slane %v1768, %v1776
    %v1780 = vadd.f32 %v1766, %v1773
    %v1781 = vadd.f32 %v1767, %v1777
    %v1782 = vmul.f32 %v1780, 0.5
    %v1783 = vmul.f32 %v1781, 0.5
    %v1784 = vmul.f32 %v1780, %v1780
    %v1785 = vmul.f32 %v1781, %v1781
    %v1786 = vmul.f32 %v1784, %v1780
    %v1787 = vmul.f32 %v1785, %v1781
    %v1788 = vmul.f32 %v1786, 0.044715
    %v1789 = vmul.f32 %v1787, 0.044715
    %v1790 = vadd.f32 %v1780, %v1788
    %v1791 = vadd.f32 %v1781, %v1789
    %v1792 = vmul.f32 %v1790, 0.7978846
    %v1793 = vmul.f32 %v1791, 0.7978846
    %v1794 = vtanh.pop %v1792
    %v1795 = vtanh.pop %v1793
    %v1796 = vadd.f32 %v1794, 1.0
    %v1797 = vadd.f32 %v1795, 1.0
    %v1798 = vmul.f32 %v1782, %v1796
    %v1799 = vmul.f32 %v1783, %v1797
    %v1800 = vld [vmem:[%s7] sm:$0xff]
    %v1801 = vld [vmem:[%s7 + $0x8] sm:$0xff]
    %v1802 = vld [vmem:[%s7 + $0x10] sm:$0xff]
    %v1803 = vld [vmem:[%s7 + $0x18] sm:$0xff]
    %v1804 = vld [vmem:[%s7 + $0x20] sm:$0xff]
    %v1805 = vld [vmem:[%s7 + $0x28] sm:$0xff]
    %v1806 = vld [vmem:[%s7 + $0x30] sm:$0xff]
    %v1807 = vld [vmem:[%s7 + $0x38] sm:$0xff]
    %v1808 = vld [vmem:[%s7 + $0x40] sm:$0xff]
    %v1809 = vld [vmem:[%s7 + $0x48] sm:$0xff]
    %v1810 = vld [vmem:[%s7 + $0x50] sm:$0xff]
    %v1811 = vld [vmem:[%s7 + $0x58] sm:$0xff]
    %v1812 = vld [vmem:[%s7 + $0x60] sm:$0xff]
    %v1813 = vld [vmem:[%s7 + $0x68] sm:$0xff]
    %v1814 = vld [vmem:[%s7 + $0x70] sm:$0xff]
    %v1815 = vld [vmem:[%s7 + $0x78] sm:$0xff]
    %v1816 = vld [vmem:[%s7 + $0x80] sm:$0xff]
    %v1817 = vld [vmem:[%s7 + $0x88] sm:$0xff]
    %v1818 = vld [vmem:[%s7 + $0x90] sm:$0xff]
    %v1819 = vld [vmem:[%s7 + $0x98] sm:$0xff]
    %v1820 = vld [vmem:[%s7 + $0xa0] sm:$0xff]
    %v1821 = vld [vmem:[%s7 + $0xa8] sm:$0xff]
    %v1822 = vld [vmem:[%s7 + $0xb0] sm:$0xff]
    %v1823 = vld [vmem:[%s7 + $0xb8] sm:$0xff]
    %v1824 = vld [vmem:[%s7 + $0xc0] sm:$0xff]
    %v1825 = vld [vmem:[%s7 + $0xc8] sm:$0xff]
    %v1826 = vld [vmem:[%s7 + $0xd0] sm:$0xff]
    %v1827 = vld [vmem:[%s7 + $0xd8] sm:$0xff]
    %v1828 = vld [vmem:[%s7 + $0xe0] sm:$0xff]
    %v1829 = vld [vmem:[%s7 + $0xe8] sm:$0xff]
    %v1830 = vld [vmem:[%s7 + $0xf0] sm:$0xff]
    %v1831 = vld [vmem:[%s7 + $0xf8] sm:$0xff]
    %v1832 = vld [vmem:[%s8] sm:$0x1]
    %v1834 = vlaneseq
    %v1835 = vshrl.u32 %v1834, 7
    %v1836 = vsub.s32 0, %v1835
    %v1837 = vrot.slane %v1832, %v1836
    %1839 = vmatprep.subr.mxu0 0.0
    %1840 = vmatpush1.msra.mxu0 %v1815
    %1841 = vmatprep.subr.mxu0 0.0
    %1842 = vmatpush1.msra.mxu0 %v1814
    %1843 = vmatprep.subr.mxu0 0.0
    %1844 = vmatpush1.msra.mxu0 %v1813
    %1845 = vmatprep.subr.mxu0 0.0
    %1846 = vmatpush1.msra.mxu0 %v1812
    %1847 = vmatprep.subr.mxu0 0.0
    %1848 = vmatpush1.msra.mxu0 %v1811
    %1849 = vmatprep.subr.mxu0 0.0
    %1850 = vmatpush1.msra.mxu0 %v1810
    %1851 = vmatprep.subr.mxu0 0.0
    %1852 = vmatpush1.msra.mxu0 %v1809
    %1853 = vmatprep.subr.mxu0 0.0
    %1854 = vmatpush1.msra.mxu0 %v1808
    %1855 = vmatprep.subr.mxu0 0.0
    %1856 = vmatpush1.msra.mxu0 %v1807
    %1857 = vmatprep.subr.mxu0 0.0
    %1858 = vmatpush1.msra.mxu0 %v1806
    %1859 = vmatprep.subr.mxu0 0.0
    %1860 = vmatpush1.msra.mxu0 %v1805
    %1861 = vmatprep.subr.mxu0 0.0
    %1862 = vmatpush1.msra.mxu0 %v1804
    %1863 = vmatprep.subr.mxu0 0.0
    %1864 = vmatpush1.msra.mxu0 %v1803
    %1865 = vmatprep.subr.mxu0 0.0
    %1866 = vmatpush1.msra.mxu0 %v1802
    %1867 = vmatprep.subr.mxu0 0.0
    %1868 = vmatpush1.msra.mxu0 %v1801
    %1869 = vmatprep.subr.mxu0 0.0
    %1870 = vmatpush1.msra.mxu0 %v1800
    %1871 = vmatprep.subr.mxu0 0.0
    %1872 = vmatpush2.msra.mxu0 %v1831
    %1873 = vmatprep.subr.mxu0 0.0
    %1874 = vmatpush2.msra.mxu0 %v1830
    %1875 = vmatprep.subr.mxu0 0.0
    %1876 = vmatpush2.msra.mxu0 %v1829
    %1877 = vmatprep.subr.mxu0 0.0
    %1878 = vmatpush2.msra.mxu0 %v1828
    %1879 = vmatprep.subr.mxu0 0.0
    %1880 = vmatpush2.msra.mxu0 %v1827
    %1881 = vmatprep.subr.mxu0 0.0
    %1882 = vmatpush2.msra.mxu0 %v1826
    %1883 = vmatprep.subr.mxu0 0.0
    %1884 = vmatpush2.msra.mxu0 %v1825
    %1885 = vmatprep.subr.mxu0 0.0
    %1886 = vmatpush2.msra.mxu0 %v1824
    %1887 = vmatprep.subr.mxu0 0.0
    %1888 = vmatpush2.msra.mxu0 %v1823
    %1889 = vmatprep.subr.mxu0 0.0
    %1890 = vmatpush2.msra.mxu0 %v1822
    %1891 = vmatprep.subr.mxu0 0.0
    %1892 = vmatpush2.msra.mxu0 %v1821
    %1893 = vmatprep.subr.mxu0 0.0
    %1894 = vmatpush2.msra.mxu0 %v1820
    %1895 = vmatprep.subr.mxu0 0.0
    %1896 = vmatpush2.msra.mxu0 %v1819
    %1897 = vmatprep.subr.mxu0 0.0
    %1898 = vmatpush2.msra.mxu0 %v1818
    %1899 = vmatprep.subr.mxu0 0.0
    %1900 = vmatpush2.msra.mxu0 %v1817
    %1901 = vmatprep.subr.mxu0 0.0
    %1902 = vmatpush2.msra.mxu0 %v1816
    %1903 = vmatprep.mubr.f32.mxu0 %v1799
    %1904 = vmatmul.mubr.f32.gmra.mxu0 %v1798
    %v1905 = vpop.f32.mrf.mxu0
    %v1906 = vadd.f32 %v1837, %v1905
    %v1907 = vpop.f32.mrf.mxu0
    %1908 = vdwg.mxu0
    %v1909 = vmul.f32 %v1906, 0.5
    %v1910 = vmul.f32 %v1906, %v1906
    %v1911 = vmul.f32 %v1910, %v1906
    %v1912 = vmul.f32 %v1911, 0.044715
    %v1913 = vadd.f32 %v1906, %v1912
    %v1914 = vmul.f32 %v1913, 0.7978846
    %v1915 = vtanh.pop %v1914
    %v1916 = vadd.f32 %v1915, 1.0
    %v1917 = vmul.f32 %v1909, %v1916
    %v1918 = vld [vmem:[%s9] sm:$0xff]
    %v1919 = vld [vmem:[%s9 + $0x8] sm:$0xff]
    %v1920 = vld [vmem:[%s9 + $0x10] sm:$0xff]
    %v1921 = vld [vmem:[%s9 + $0x18] sm:$0xff]
    %v1922 = vld [vmem:[%s9 + $0x20] sm:$0xff]
    %v1923 = vld [vmem:[%s9 + $0x28] sm:$0xff]
    %v1924 = vld [vmem:[%s9 + $0x30] sm:$0xff]
    %v1925 = vld [vmem:[%s9 + $0x38] sm:$0xff]
    %v1926 = vld [vmem:[%s9 + $0x40] sm:$0xff]
    %v1927 = vld [vmem:[%s9 + $0x48] sm:$0xff]
    %v1928 = vld [vmem:[%s9 + $0x50] sm:$0xff]
    %v1929 = vld [vmem:[%s9 + $0x58] sm:$0xff]
    %v1930 = vld [vmem:[%s9 + $0x60] sm:$0xff]
    %v1931 = vld [vmem:[%s9 + $0x68] sm:$0xff]
    %v1932 = vld [vmem:[%s9 + $0x70] sm:$0xff]
    %v1933 = vld [vmem:[%s9 + $0x78] sm:$0xff]
    %v1934 = vld [vmem:[%s10] sm:$0x1]
    %v1936 = vlaneseq
    %v1937 = vshrl.u32 %v1936, 7
    %v1938 = vsub.s32 0, %v1937
    %v1939 = vrot.slane %v1934, %v1938
    %1941 = vmatprep.subr.mxu0 0.0
    %1942 = vmatpush1.msra.mxu0 %v1933
    %1943 = vmatprep.subr.mxu0 0.0
    %1944 = vmatpush1.msra.mxu0 %v1932
    %1945 = vmatprep.subr.mxu0 0.0
    %1946 = vmatpush1.msra.mxu0 %v1931
    %1947 = vmatprep.subr.mxu0 0.0
    %1948 = vmatpush1.msra.mxu0 %v1930
    %1949 = vmatprep.subr.mxu0 0.0
    %1950 = vmatpush1.msra.mxu0 %v1929
    %1951 = vmatprep.subr.mxu0 0.0
    %1952 = vmatpush1.msra.mxu0 %v1928
    %1953 = vmatprep.subr.mxu0 0.0
    %1954 = vmatpush1.msra.mxu0 %v1927
    %1955 = vmatprep.subr.mxu0 0.0
    %1956 = vmatpush1.msra.mxu0 %v1926
    %1957 = vmatprep.subr.mxu0 0.0
    %1958 = vmatpush1.msra.mxu0 %v1925
    %1959 = vmatprep.subr.mxu0 0.0
    %1960 = vmatpush1.msra.mxu0 %v1924
    %1961 = vmatprep.subr.mxu0 0.0
    %1962 = vmatpush1.msra.mxu0 %v1923
    %1963 = vmatprep.subr.mxu0 0.0
    %1964 = vmatpush1.msra.mxu0 %v1922
    %1965 = vmatprep.subr.mxu0 0.0
    %1966 = vmatpush1.msra.mxu0 %v1921
    %1967 = vmatprep.subr.mxu0 0.0
    %1968 = vmatpush1.msra.mxu0 %v1920
    %1969 = vmatprep.subr.mxu0 0.0
    %1970 = vmatpush1.msra.mxu0 %v1919
    %1971 = vmatprep.subr.mxu0 0.0
    %1972 = vmatpush1.msra.mxu0 %v1918
    %1973 = vmatprep.subr.mxu0 0.0
    %1974 = vmatpush2.msra.mxu0 0.0
    %1975 = vmatprep.subr.mxu0 0.0
    %1976 = vmatpush2.msra.mxu0 0.0
    %1977 = vmatprep.subr.mxu0 0.0
    %1978 = vmatpush2.msra.mxu0 0.0
    %1979 = vmatprep.subr.mxu0 0.0
    %1980 = vmatpush2.msra.mxu0 0.0
    %1981 = vmatprep.subr.mxu0 0.0
    %1982 = vmatpush2.msra.mxu0 0.0
    %1983 = vmatprep.subr.mxu0 0.0
    %1984 = vmatpush2.msra.mxu0 0.0
    %1985 = vmatprep.subr.mxu0 0.0
    %1986 = vmatpush2.msra.mxu0 0.0
    %1987 = vmatprep.subr.mxu0 0.0
    %1988 = vmatpush2.msra.mxu0 0.0
    %1989 = vmatprep.subr.mxu0 0.0
    %1990 = vmatpush2.msra.mxu0 0.0
    %1991 = vmatprep.subr.mxu0 0.0
    %1992 = vmatpush2.msra.mxu0 0.0
    %1993 = vmatprep.subr.mxu0 0.0
    %1994 = vmatpush2.msra.mxu0 0.0
    %1995 = vmatprep.subr.mxu0 0.0
    %1996 = vmatpush2.msra.mxu0 0.0
    %1997 = vmatprep.subr.mxu0 0.0
    %1998 = vmatpush2.msra.mxu0 0.0
    %1999 = vmatprep.subr.mxu0 0.0
    %2000 = vmatpush2.msra.mxu0 0.0
    %2001 = vmatprep.subr.mxu0 0.0
    %2002 = vmatpush2.msra.mxu0 0.0
    %2003 = vmatprep.subr.mxu0 0.0
    %2004 = vmatpush2.msra.mxu0 0.0
    %2005 = vmatprep.mubr.f32.mxu0 0.0
    %2006 = vmatmul.mubr.f32.gmra.mxu0 %v1917
    %v2007 = vpop.f32.mrf.mxu0
    %v2008 = vadd.f32 %v1939, %v2007
    %v2009 = vpop.f32.mrf.mxu0
    %2010 = vdwg.mxu0
    %v2011 = vmul.f32 %v2008, 0.5
    %v2012 = vmul.f32 %v2008, %v2008
    %v2013 = vmul.f32 %v2012, %v2008
    %v2014 = vmul.f32 %v2013, 0.044715
    %v2015 = vadd.f32 %v2008, %v2014
    %v2016 = vmul.f32 %v2015, 0.7978846
    %v2017 = vtanh.pop %v2016
    %v2018 = vadd.f32 %v2017, 1.0
    %v2019 = vmul.f32 %v2011, %v2018
    %v2020 = vld [vmem:[%s11] sm:$0xff]
    %v2021 = vld [vmem:[%s11 + $0x8] sm:$0xff]
    %v2022 = vld [vmem:[%s11 + $0x10] sm:$0xff]
    %v2023 = vld [vmem:[%s11 + $0x18] sm:$0xff]
    %v2024 = vld [vmem:[%s11 + $0x20] sm:$0xff]
    %v2025 = vld [vmem:[%s11 + $0x28] sm:$0xff]
    %v2026 = vld [vmem:[%s11 + $0x30] sm:$0xff]
    %v2027 = vld [vmem:[%s11 + $0x38] sm:$0xff]
    %s2028 = sld [smem:[#allocation2]]
    %v2029 = vstv %s2028
    %v2031 = vsel %vm171, %v2019, 0
    %2033 = vmatprep.subr.mxu0 0.0
    %2034 = vmatpush1.msra.mxu0 0.0
    %2035 = vmatprep.subr.mxu0 0.0
    %2036 = vmatpush1.msra.mxu0 0.0
    %2037 = vmatprep.subr.mxu0 0.0
    %2038 = vmatpush1.msra.mxu0 0.0
    %2039 = vmatprep.subr.mxu0 0.0
    %2040 = vmatpush1.msra.mxu0 0.0
    %2041 = vmatprep.subr.mxu0 0.0
    %2042 = vmatpush1.msra.mxu0 0.0
    %2043 = vmatprep.subr.mxu0 0.0
    %2044 = vmatpush1.msra.mxu0 0.0
    %2045 = vmatprep.subr.mxu0 0.0
    %2046 = vmatpush1.msra.mxu0 0.0
    %2047 = vmatprep.subr.mxu0 0.0
    %2048 = vmatpush1.msra.mxu0 0.0
    %2049 = vmatprep.subr.mxu0 0.0
    %2050 = vmatpush1.msra.mxu0 %v2027
    %2051 = vmatprep.subr.mxu0 0.0
    %2052 = vmatpush1.msra.mxu0 %v2026
    %2053 = vmatprep.subr.mxu0 0.0
    %2054 = vmatpush1.msra.mxu0 %v2025
    %2055 = vmatprep.subr.mxu0 0.0
    %2056 = vmatpush1.msra.mxu0 %v2024
    %2057 = vmatprep.subr.mxu0 0.0
    %2058 = vmatpush1.msra.mxu0 %v2023
    %2059 = vmatprep.subr.mxu0 0.0
    %2060 = vmatpush1.msra.mxu0 %v2022
    %2061 = vmatprep.subr.mxu0 0.0
    %2062 = vmatpush1.msra.mxu0 %v2021
    %2063 = vmatprep.subr.mxu0 0.0
    %2064 = vmatpush1.msra.mxu0 %v2020
    %2065 = vmatprep.subr.mxu0 0.0
    %2066 = vmatpush2.msra.mxu0 0.0
    %2067 = vmatprep.subr.mxu0 0.0
    %2068 = vmatpush2.msra.mxu0 0.0
    %2069 = vmatprep.subr.mxu0 0.0
    %2070 = vmatpush2.msra.mxu0 0.0
    %2071 = vmatprep.subr.mxu0 0.0
    %2072 = vmatpush2.msra.mxu0 0.0
    %2073 = vmatprep.subr.mxu0 0.0
    %2074 = vmatpush2.msra.mxu0 0.0
    %2075 = vmatprep.subr.mxu0 0.0
    %2076 = vmatpush2.msra.mxu0 0.0
    %2077 = vmatprep.subr.mxu0 0.0
    %2078 = vmatpush2.msra.mxu0 0.0
    %2079 = vmatprep.subr.mxu0 0.0
    %2080 = vmatpush2.msra.mxu0 0.0
    %2081 = vmatprep.subr.mxu0 0.0
    %2082 = vmatpush2.msra.mxu0 0.0
    %2083 = vmatprep.subr.mxu0 0.0
    %2084 = vmatpush2.msra.mxu0 0.0
    %2085 = vmatprep.subr.mxu0 0.0
    %2086 = vmatpush2.msra.mxu0 0.0
    %2087 = vmatprep.subr.mxu0 0.0
    %2088 = vmatpush2.msra.mxu0 0.0
    %2089 = vmatprep.subr.mxu0 0.0
    %2090 = vmatpush2.msra.mxu0 0.0
    %2091 = vmatprep.subr.mxu0 0.0
    %2092 = vmatpush2.msra.mxu0 0.0
    %2093 = vmatprep.subr.mxu0 0.0
    %2094 = vmatpush2.msra.mxu0 0.0
    %2095 = vmatprep.subr.mxu0 0.0
    %2096 = vmatpush2.msra.mxu0 0.0
    %2097 = vmatprep.mubr.f32.mxu0 0.0
    %2098 = vmatmul.mubr.f32.gmra.mxu0 %v2031
    %v2099 = vpop.f32.mrf.mxu0
    %v2100 = vadd.f32 %v2029, %v2099
    %v2101 = vpop.f32.mrf.mxu0
    %2102 = vdwg.mxu0
    %vm2103 = vcmask 7168
    %2104 = vst.msk [vmem:[%s13] sm:$0xff] %vm2103, %v2100
    // Predicated region
    $region74: #{tpu_custom_call.1} parent=1 // pred_check
      _
    $region75: #{tpu_custom_call.1} parent=1 // pred_check_branch
      %2106 = sbr.rel (0) target = $region77
    $region76: #{tpu_custom_call.1} parent=1 // pred_region
      _
    $region77: #{tpu_custom_call.1} parent=1 // pred_fallthru
      _
    // Predicated region
    $region78: #{tpu_custom_call.1} parent=1 // pred_check
      _
    $region79: #{tpu_custom_call.1} parent=1 // pred_check_branch
      %2108 = sbr.rel (0) target = $region81
    $region80: #{tpu_custom_call.1} parent=1 // pred_region
      _
    $region81: #{tpu_custom_call.1} parent=1 // pred_fallthru
      _
    %2109 = vsyncpa [#allocation4], 1
    %2110 = vsyncpa [#allocation6], 1
    %2111 = vsyncpa [#allocation9], 1

</llo_original>
